<compile_context>
chip_gen: v7x
topology: tpu7x:2x2x1
jax: 0.10.0
libtpu: 0.0.40
codegen_flags: <defaults>
</compile_context>

<pallas_src>
import jax
import jax.numpy as jnp
from jax.experimental import pallas as pl
from jax.experimental.pallas import tpu as pltpu


def _round_up(x, m):
    return ((x + m - 1) // m) * m


def _slab_layout(E, Dc):
    """Row offsets of the packed parameter slab (all 8-sublane aligned)."""
    off_b = _round_up(E, 8)      # b_red row
    off_ac = off_b + 8           # att_cate row
    off_an = off_ac + 8          # att_news row (cols [:Dn])
    rows = off_an + 8
    return off_b, off_ac, off_an, rows


def pack_mpnr_params(w_red, b_red, att_news, att_cate):
    """Pack the 4 small parameters into one 8-sublane-aligned VMEM slab.

    Parameters are constant across calls, so this runs ONCE at init (perf
    review: removes the per-call dynamic-update-slice XLA ops)."""
    E, Dc = w_red.shape
    Dn = att_news.shape[-1]
    off_b, off_ac, off_an, rows = _slab_layout(E, Dc)
    slab = jnp.zeros((rows, Dc), jnp.float32)
    slab = slab.at[:E, :].set(w_red.astype(jnp.float32))
    slab = slab.at[off_b, :].set(b_red.reshape(-1).astype(jnp.float32))
    slab = slab.at[off_ac, :].set(att_cate.reshape(-1).astype(jnp.float32))
    slab = slab.at[off_an, :Dn].set(att_news.reshape(-1).astype(jnp.float32))
    return slab


def mpnr_score_kernel(candi_ref, hist_ref, cand_cat_raw_ref, his_cat_raw_ref,
                      his_mask_ref, pop_news_ref, pop_cat_ref, param_ref,
                      scores_ref, loss_ref):
    B, C, Dn = candi_ref.shape
    _, N, _ = hist_ref.shape
    E = cand_cat_raw_ref.shape[-1]
    Dc = param_ref.shape[-1]
    off_b, off_ac, off_an, _ = _slab_layout(E, Dc)

    candi = candi_ref[...]                           # (B, C, Dn)
    hist = hist_ref[...]                             # (B, N, Dn)
    mask = (his_mask_ref[...] > 0.5)[:, None, :]     # (B, 1, N) bool

    # packed parameter slab (static, 8-aligned row slices, lane offset 0)
    w_red = param_ref[:E, :]                         # (E, Dc)
    b_red = param_ref[off_b:off_b + 1, :]            # (1, Dc)
    att_cate = param_ref[off_ac:off_ac + 1, :]       # (1, Dc)
    att_news = param_ref[off_an:off_an + 1, :Dn]     # (1, Dn)

    # ---- CategoryEncoder.reduce_dim : two MXU matmuls against resident w_red
    # (no concat in the wrapper, no sublane-offset result slices; the leading
    # dim split reshape keeps the lane dim untouched).
    # TODO(synk): at production E/Dc cast operands to bf16 (MXU native) with
    # f32 accumulation; needs tolerance re-validation.
    cand_cat = (jnp.dot(cand_cat_raw_ref[...], w_red,
                        preferred_element_type=jnp.float32)
                + b_red).reshape(B, C, Dc)           # (B, C, Dc)
    his_cat = (jnp.dot(his_cat_raw_ref[...], w_red,
                       preferred_element_type=jnp.float32)
               + b_red).reshape(B, N, Dc)            # (B, N, Dc)

    # ---- UserAttention --------------------------------------------------------
    # q-length is 1: logits on the VPU (+ XLU lane reduce) instead of B tiny
    # M=1 MXU matmuls; the weighted sum stays on the MXU (proven einsum path).
    def user_attention(kv, att):                     # kv (B, N, D), att (1, D)
        D = kv.shape[-1]
        logits = jnp.sum(kv * att.reshape(1, 1, D), axis=-1)[:, None, :]  # (B,1,N)
        # Reference fills masked *logits* with 1e-30 (not -inf); padded items
        # therefore still get near-uniform weight — faithfully reproduced.
        logits = jnp.where(mask, logits, 1e-30)
        m = jnp.max(logits, axis=-1, keepdims=True)
        e = jnp.exp(logits - m)
        p = e / jnp.sum(e, axis=-1, keepdims=True)                        # (B,1,N)
        return jnp.einsum('bqk,bkd->bqd', p, kv,
                          preferred_element_type=jnp.float32)             # (B,1,D)

    user_fea = user_attention(hist, att_news)        # (B, 1, Dn)
    cate_fea = user_attention(his_cat, att_cate)     # (B, 1, Dc)

    # ---- matching scores ------------------------------------------------------
    # MXU einsums produce (B, 1, C) with candidates lane-dense (the natural
    # lane-major orientation for the output store); wrapper squeezes to (B, C).
    feat_news = pop_news_ref[...] * candi            # (B, C, Dn)
    feat_cat = pop_cat_ref[...] * cand_cat           # (B, C, Dc)
    scores_ref[...] = (
        jnp.einsum('bqf,bcf->bqc', user_fea, feat_news,
                   preferred_element_type=jnp.float32)
        + jnp.einsum('bqf,bcf->bqc', cate_fea, feat_cat,
                     preferred_element_type=jnp.float32))                 # (B,1,C)

    # ---- decorrelation loss ---------------------------------------------------
    # per-feature batch covariance of (B, C) slices; accumulate
    # sum(cov^2) - trace(cov^2).  One fused broadcast-multiply-reduce (no
    # per-batch unrolled loop); diagonal straight from (C, F) second moments.
    def decor(x):                                    # x: (B, C, F)
        inv_b = 1.0 / B
        xx = jnp.sum(x[:, :, None, :] * x[:, None, :, :], axis=0)  # (C, C, F)
        xs = jnp.sum(x, axis=0)                                    # (C, F)
        x2 = jnp.sum(x * x, axis=0)                                # (C, F)
        mean = xs * inv_b
        cov = xx * inv_b - mean[:, None, :] * mean[None, :, :]
        diag = x2 * inv_b - mean * mean                            # cov[i,i,f]
        return jnp.sum(cov * cov) - jnp.sum(diag * diag)

    loss = decor(feat_news) + decor(feat_cat)
    # (1,1) VMEM tile output: scalar SMEM stores from vector-reduced values are
    # not a proven lowering path; this single tiny DMA is negligible.
    loss_ref[...] = jnp.reshape(loss, (1, 1))


def _vmem_spec():
    # whole-array block resident in VMEM; no grid => single-buffered, no
    # needless double-buffering (perf review, v7x VMEM budget).
    return pl.BlockSpec(memory_space=pltpu.MemorySpace.VMEM)


@jax.jit
def mpnr_scores(candi_repr, hist_repr, cand_cat_raw, his_cat_raw, his_mask_f,
                pop_news, pop_cat, param_slab):
    B, C, Dn = candi_repr.shape
    _, N, _ = hist_repr.shape
    E = cand_cat_raw.shape[-1]

    # contiguous metadata-only reshapes (free in XLA); keeps the matmul inputs
    # flat so the kernel never slices at a sublane offset.
    cand_flat = cand_cat_raw.reshape(B * C, E)
    his_flat = his_cat_raw.reshape(B * N, E)

    args = (candi_repr, hist_repr, cand_flat, his_flat, his_mask_f,
            pop_news, pop_cat, param_slab)
    scores3, loss = pl.pallas_call(
        mpnr_score_kernel,
        out_shape=(jax.ShapeDtypeStruct((B, 1, C), jnp.float32),
                   jax.ShapeDtypeStruct((1, 1), jnp.float32)),
        in_specs=[_vmem_spec() for _ in args],
        out_specs=(_vmem_spec(), _vmem_spec()),
    )(*args)
    return scores3.reshape(B, C), loss


if __name__ == "__main__":
    B, C, N, L = 2, 4, 6, 8          # batch, candidates, clicked news, title len
    V, WD = 20, 24                   # word vocab / word-embedding dim (stand-in)
    Dn = 32                          # news_embed_dim
    E = 16                           # pretrained category embedding dim
    Dc = 64                          # output_dim - news_embed_dim
    OUT = Dn + Dc                    # 96
    NUM_CAT, PAD_CAT = 10, 0
    POP = 5                          # pop_size

    key = jax.random.PRNGKey(0)
    ks = jax.random.split(key, 17)

    # ---- deterministic parameters ------------------------------------------
    word_emb = jax.random.normal(ks[0], (V, WD), jnp.float32)
    w_news = jax.random.normal(ks[1], (WD, Dn), jnp.float32) / jnp.sqrt(WD)
    b_news = jax.random.normal(ks[2], (Dn,), jnp.float32) * 0.1
    cat_table = jax.random.normal(ks[3], (NUM_CAT, E), jnp.float32)
    cat_table = cat_table.at[PAD_CAT].set(0.0)          # padding_idx row
    w_red = jax.random.normal(ks[4], (E, Dc), jnp.float32) / jnp.sqrt(E)
    b_red = jax.random.normal(ks[5], (1, Dc), jnp.float32) * 0.1
    att_news = jax.random.normal(ks[6], (1, Dn), jnp.float32) / jnp.sqrt(Dn)
    att_cate = jax.random.normal(ks[7], (1, Dc), jnp.float32) / jnp.sqrt(Dc)
    pop_table = jax.random.normal(ks[8], (POP, OUT), jnp.float32)

    # hoisted once at init (constant across calls):
    param_slab = pack_mpnr_params(w_red, b_red, att_news, att_cate)
    pop_table_news = pop_table[:, :Dn]                  # split once, not per call
    pop_table_cat = pop_table[:, Dn:]

    # ---- inputs --------------------------------------------------------------
    title = jax.random.randint(ks[9], (B, C, L), 0, V)
    title_mask = (jax.random.uniform(ks[10], (B, C, L)) > 0.2).astype(jnp.float32)
    his_title = jax.random.randint(ks[11], (B, N, L), 0, V)
    his_title_mask = (jax.random.uniform(ks[12], (B, N, L)) > 0.2).astype(jnp.float32)
    his_mask = jax.random.uniform(ks[13], (B, N)) > 0.3
    category = jax.random.randint(ks[14], (B, C), 0, NUM_CAT)
    his_category = jax.random.randint(ks[15], (B, N), 0, NUM_CAT)
    popularity = jax.random.randint(ks[16], (B, C), 0, POP)

    # ---- NewsEncoder stand-in (plain-JAX glue) -------------------------------
    # TODO(synk): NewsEncoder is not defined in the reference file; a simple
    # masked-mean word-embedding + Linear stand-in is used for news_repr.
    def news_repr(tok, msk):
        emb = word_emb[tok]                               # (..., L, WD)
        m = msk[..., None]
        pooled = (emb * m).sum(-2) / jnp.maximum(m.sum(-2), 1.0)
        return pooled @ w_news + b_news                   # (..., Dn)

    candi_repr = news_repr(title, title_mask)             # (B, C, Dn)
    hist_repr = news_repr(his_title, his_title_mask)      # (B, N, Dn)

    cand_cat_raw = cat_table[category]                    # (B, C, E)
    his_cat_raw = cat_table[his_category]                 # (B, N, E)
    pop_news = pop_table_news[popularity]                 # (B, C, Dn)
    pop_cat = pop_table_cat[popularity]                   # (B, C, Dc)

    scores, loss = mpnr_scores(candi_repr, hist_repr, cand_cat_raw, his_cat_raw,
                               his_mask.astype(jnp.float32),
                               pop_news, pop_cat, param_slab)
    jax.block_until_ready((scores, loss))

    # ---- pure-JAX reference (mirrors the PyTorch forward, eval dropout) ------
    def reference():
        pop_emb = pop_table[popularity]                   # (B, C, OUT)
        cand_cat = cand_cat_raw @ w_red + b_red[0]
        his_cat = his_cat_raw @ w_red + b_red[0]

        def uattn(k_, v_, att):
            logits = jnp.einsum('bnd,d->bn', k_, att[0])
            logits = jnp.where(his_mask, logits, 1e-30)
            p = jax.nn.softmax(logits, axis=-1)
            return jnp.einsum('bn,bnd->bd', p, v_)

        user_fea = uattn(hist_repr, hist_repr, att_news)
        cate_fea = uattn(his_cat, his_cat, att_cate)
        news_full = jnp.concatenate([candi_repr, cand_cat], -1)         # (B,C,OUT)
        user_full = jnp.concatenate([user_fea, cate_fea], -1)[:, None]  # (B,1,OUT)
        s = jnp.sum(pop_emb * news_full * user_full, -1)
        feat = pop_emb * news_full
        l = 0.0
        for f in range(OUT):
            cf = feat[:, :, f]                        # (B, C)
            cv = cf.T @ cf / B
            e = jnp.mean(cf, 0)[:, None]
            cv = cv - e @ e.T
            sq = cv * cv
            l = l + jnp.sum(sq) - jnp.trace(sq)
        return s, l

    s_ref, l_ref = reference()
    assert jnp.allclose(scores, s_ref, rtol=2e-3, atol=2e-3), (scores, s_ref)
    assert jnp.allclose(loss[0, 0], l_ref, rtol=2e-3, atol=2e-3), (loss, l_ref)

    print("KERNEL_OK")
</pallas_src>

<mosaic_0001>
module attributes {stable_mosaic.version = 11 : i64} {
  func.func @mpnr_score_kernel(%arg0: memref<2x4x32xf32, #tpu.memory_space<vmem>>, %arg1: memref<2x6x32xf32, #tpu.memory_space<vmem>>, %arg2: memref<8x16xf32, #tpu.memory_space<vmem>>, %arg3: memref<12x16xf32, #tpu.memory_space<vmem>>, %arg4: memref<2x6xf32, #tpu.memory_space<vmem>>, %arg5: memref<2x4x32xf32, #tpu.memory_space<vmem>>, %arg6: memref<2x4x64xf32, #tpu.memory_space<vmem>>, %arg7: memref<40x64xf32, #tpu.memory_space<vmem>>, %arg8: memref<2x1x4xf32, #tpu.memory_space<vmem>>, %arg9: memref<1x1xf32, #tpu.memory_space<vmem>>) attributes {dimension_semantics = [], scalar_prefetch = 0 : i64, scratch_operands = 0 : i64, tpu.core_type = #tpu.core_type<tc>} {
    %c0 = arith.constant 0 : index
    %c0_0 = arith.constant 0 : index
    %c0_1 = arith.constant 0 : index
    %0 = vector.load %arg0[%c0, %c0_0, %c0_1] : memref<2x4x32xf32, #tpu.memory_space<vmem>>, vector<2x4x32xf32>
    %c0_2 = arith.constant 0 : index
    %c0_3 = arith.constant 0 : index
    %c0_4 = arith.constant 0 : index
    %1 = vector.load %arg1[%c0_2, %c0_3, %c0_4] : memref<2x6x32xf32, #tpu.memory_space<vmem>>, vector<2x6x32xf32>
    %c0_5 = arith.constant 0 : index
    %c0_6 = arith.constant 0 : index
    %2 = vector.load %arg4[%c0_5, %c0_6] : memref<2x6xf32, #tpu.memory_space<vmem>>, vector<2x6xf32>
    %cst = arith.constant 5.000000e-01 : f32
    %3 = vector.broadcast %cst : f32 to vector<2x6xf32>
    %4 = arith.cmpf ogt, %2, %3 : vector<2x6xf32>
    %5 = vector.shape_cast %4 : vector<2x6xi1> to vector<2x1x6xi1>
    %c0_7 = arith.constant 0 : index
    %c0_8 = arith.constant 0 : index
    %6 = vector.load %arg7[%c0_7, %c0_8] : memref<40x64xf32, #tpu.memory_space<vmem>>, vector<16x64xf32>
    %c16 = arith.constant 16 : index
    %c0_9 = arith.constant 0 : index
    %7 = vector.load %arg7[%c16, %c0_9] : memref<40x64xf32, #tpu.memory_space<vmem>>, vector<1x64xf32>
    %c24 = arith.constant 24 : index
    %c0_10 = arith.constant 0 : index
    %8 = vector.load %arg7[%c24, %c0_10] : memref<40x64xf32, #tpu.memory_space<vmem>>, vector<1x64xf32>
    %c32 = arith.constant 32 : index
    %c0_11 = arith.constant 0 : index
    %9 = vector.load %arg7[%c32, %c0_11] : memref<40x64xf32, #tpu.memory_space<vmem>>, vector<1x32xf32>
    %c0_12 = arith.constant 0 : index
    %c0_13 = arith.constant 0 : index
    %10 = vector.load %arg2[%c0_12, %c0_13] : memref<8x16xf32, #tpu.memory_space<vmem>>, vector<8x16xf32>
    %cst_14 = arith.constant dense<0.000000e+00> : vector<8x64xf32>
    %11 = tpu.matmul %10, %6, %cst_14 {dimension_numbers = #tpu.dot_dimension_numbers<[1], [0], [0], [1], [0, 0, 1, 1], [], []>} : vector<8x16xf32>, vector<16x64xf32>, vector<8x64xf32> -> vector<8x64xf32>
    %12 = vector.broadcast %7 : vector<1x64xf32> to vector<8x64xf32>
    %13 = arith.addf %11, %12 : vector<8x64xf32>
    %14 = vector.shape_cast %13 : vector<8x64xf32> to vector<2x4x64xf32>
    %c0_15 = arith.constant 0 : index
    %c0_16 = arith.constant 0 : index
    %15 = vector.load %arg3[%c0_15, %c0_16] : memref<12x16xf32, #tpu.memory_space<vmem>>, vector<12x16xf32>
    %cst_17 = arith.constant dense<0.000000e+00> : vector<12x64xf32>
    %16 = tpu.matmul %15, %6, %cst_17 {dimension_numbers = #tpu.dot_dimension_numbers<[1], [0], [0], [1], [0, 0, 1, 1], [], []>} : vector<12x16xf32>, vector<16x64xf32>, vector<12x64xf32> -> vector<12x64xf32>
    %17 = vector.broadcast %7 : vector<1x64xf32> to vector<12x64xf32>
    %18 = arith.addf %16, %17 : vector<12x64xf32>
    %19 = vector.shape_cast %18 : vector<12x64xf32> to vector<2x6x64xf32>
    %20 = vector.shape_cast %9 : vector<1x32xf32> to vector<1x1x32xf32>
    %21 = vector.broadcast %20 : vector<1x1x32xf32> to vector<2x6x32xf32>
    %22 = arith.mulf %1, %21 : vector<2x6x32xf32>
    %cst_18 = arith.constant dense<0.000000e+00> : vector<2x6xf32>
    %23 = vector.multi_reduction <add>, %22, %cst_18 [2] : vector<2x6x32xf32> to vector<2x6xf32>
    %24 = vector.shape_cast %23 : vector<2x6xf32> to vector<2x1x6xf32>
    %cst_19 = arith.constant 1.000000e-30 : f32
    %25 = vector.broadcast %cst_19 : f32 to vector<2x1x6xf32>
    %26 = arith.select %5, %24, %25 : vector<2x1x6xi1>, vector<2x1x6xf32>
    %cst_20 = arith.constant dense<0xFF800000> : vector<2x1xf32>
    %27 = vector.multi_reduction <maximumf>, %26, %cst_20 [2] : vector<2x1x6xf32> to vector<2x1xf32>
    %28 = vector.shape_cast %27 : vector<2x1xf32> to vector<2x1x1xf32>
    %29 = vector.broadcast %28 : vector<2x1x1xf32> to vector<2x1x6xf32>
    %30 = arith.subf %26, %29 : vector<2x1x6xf32>
    %31 = math.exp %30 : vector<2x1x6xf32>
    %cst_21 = arith.constant dense<0.000000e+00> : vector<2x1xf32>
    %32 = vector.multi_reduction <add>, %31, %cst_21 [2] : vector<2x1x6xf32> to vector<2x1xf32>
    %33 = vector.shape_cast %32 : vector<2x1xf32> to vector<2x1x1xf32>
    %34 = vector.broadcast %33 : vector<2x1x1xf32> to vector<2x1x6xf32>
    %35 = arith.divf %31, %34 : vector<2x1x6xf32>
    "tpu.trace_start"() <{level = 10 : i32, message = "bqk,bkd->bqd"}> : () -> ()
    %cst_22 = arith.constant dense<0.000000e+00> : vector<2x1x32xf32>
    %36 = tpu.matmul %35, %1, %cst_22 {dimension_numbers = #tpu.dot_dimension_numbers<[2], [1], [1], [2], [0, 0, 0, 1, 1, 2], [0], [0]>} : vector<2x1x6xf32>, vector<2x6x32xf32>, vector<2x1x32xf32> -> vector<2x1x32xf32>
    "tpu.trace_stop"() : () -> ()
    %37 = vector.shape_cast %8 : vector<1x64xf32> to vector<1x1x64xf32>
    %38 = vector.broadcast %37 : vector<1x1x64xf32> to vector<2x6x64xf32>
    %39 = arith.mulf %19, %38 : vector<2x6x64xf32>
    %cst_23 = arith.constant dense<0.000000e+00> : vector<2x6xf32>
    %40 = vector.multi_reduction <add>, %39, %cst_23 [2] : vector<2x6x64xf32> to vector<2x6xf32>
    %41 = vector.shape_cast %40 : vector<2x6xf32> to vector<2x1x6xf32>
    %cst_24 = arith.constant 1.000000e-30 : f32
    %42 = vector.broadcast %cst_24 : f32 to vector<2x1x6xf32>
    %43 = arith.select %5, %41, %42 : vector<2x1x6xi1>, vector<2x1x6xf32>
    %cst_25 = arith.constant dense<0xFF800000> : vector<2x1xf32>
    %44 = vector.multi_reduction <maximumf>, %43, %cst_25 [2] : vector<2x1x6xf32> to vector<2x1xf32>
    %45 = vector.shape_cast %44 : vector<2x1xf32> to vector<2x1x1xf32>
    %46 = vector.broadcast %45 : vector<2x1x1xf32> to vector<2x1x6xf32>
    %47 = arith.subf %43, %46 : vector<2x1x6xf32>
    %48 = math.exp %47 : vector<2x1x6xf32>
    %cst_26 = arith.constant dense<0.000000e+00> : vector<2x1xf32>
    %49 = vector.multi_reduction <add>, %48, %cst_26 [2] : vector<2x1x6xf32> to vector<2x1xf32>
    %50 = vector.shape_cast %49 : vector<2x1xf32> to vector<2x1x1xf32>
    %51 = vector.broadcast %50 : vector<2x1x1xf32> to vector<2x1x6xf32>
    %52 = arith.divf %48, %51 : vector<2x1x6xf32>
    "tpu.trace_start"() <{level = 10 : i32, message = "bqk,bkd->bqd"}> : () -> ()
    %cst_27 = arith.constant dense<0.000000e+00> : vector<2x1x64xf32>
    %53 = tpu.matmul %52, %19, %cst_27 {dimension_numbers = #tpu.dot_dimension_numbers<[2], [1], [1], [2], [0, 0, 0, 1, 1, 2], [0], [0]>} : vector<2x1x6xf32>, vector<2x6x64xf32>, vector<2x1x64xf32> -> vector<2x1x64xf32>
    "tpu.trace_stop"() : () -> ()
    %c0_28 = arith.constant 0 : index
    %c0_29 = arith.constant 0 : index
    %c0_30 = arith.constant 0 : index
    %54 = vector.load %arg5[%c0_28, %c0_29, %c0_30] : memref<2x4x32xf32, #tpu.memory_space<vmem>>, vector<2x4x32xf32>
    %55 = arith.mulf %54, %0 : vector<2x4x32xf32>
    %c0_31 = arith.constant 0 : index
    %c0_32 = arith.constant 0 : index
    %c0_33 = arith.constant 0 : index
    %56 = vector.load %arg6[%c0_31, %c0_32, %c0_33] : memref<2x4x64xf32, #tpu.memory_space<vmem>>, vector<2x4x64xf32>
    %57 = arith.mulf %56, %14 : vector<2x4x64xf32>
    "tpu.trace_start"() <{level = 10 : i32, message = "bqf,bcf->bqc"}> : () -> ()
    %cst_34 = arith.constant dense<0.000000e+00> : vector<2x1x4xf32>
    %58 = tpu.matmul %36, %55, %cst_34 {dimension_numbers = #tpu.dot_dimension_numbers<[2], [2], [1], [1], [0, 0, 0, 1, 1, 1], [0], [0]>} : vector<2x1x32xf32>, vector<2x4x32xf32>, vector<2x1x4xf32> -> vector<2x1x4xf32>
    %cst_35 = arith.constant dense<0.000000e+00> : vector<2x1x4xf32>
    %59 = tpu.matmul %53, %57, %cst_35 {dimension_numbers = #tpu.dot_dimension_numbers<[2], [2], [1], [1], [0, 0, 0, 1, 1, 1], [0], [0]>} : vector<2x1x64xf32>, vector<2x4x64xf32>, vector<2x1x4xf32> -> vector<2x1x4xf32>
    "tpu.trace_stop"() : () -> ()
    %60 = arith.addf %58, %59 : vector<2x1x4xf32>
    %c0_36 = arith.constant 0 : index
    %c0_37 = arith.constant 0 : index
    %c0_38 = arith.constant 0 : index
    %61 = vector.load %arg8[%c0_36, %c0_37, %c0_38] : memref<2x1x4xf32, #tpu.memory_space<vmem>>, vector<2x1x4xf32>
    tpu.vector_store %arg8[%c0_36, %c0_37, %c0_38], %60 {strides = array<i32>} : memref<2x1x4xf32, #tpu.memory_space<vmem>>, vector<2x1x4xf32>,
    %62 = vector.shape_cast %55 : vector<2x4x32xf32> to vector<2x4x1x32xf32>
    %63 = vector.shape_cast %55 : vector<2x4x32xf32> to vector<2x1x4x32xf32>
    %64 = vector.broadcast %62 : vector<2x4x1x32xf32> to vector<2x4x4x32xf32>
    %65 = vector.broadcast %63 : vector<2x1x4x32xf32> to vector<2x4x4x32xf32>
    %66 = arith.mulf %64, %65 : vector<2x4x4x32xf32>
    %cst_39 = arith.constant dense<0.000000e+00> : vector<4x4x32xf32>
    %67 = vector.multi_reduction <add>, %66, %cst_39 [0] : vector<2x4x4x32xf32> to vector<4x4x32xf32>
    %cst_40 = arith.constant dense<0.000000e+00> : vector<4x32xf32>
    %68 = vector.multi_reduction <add>, %55, %cst_40 [0] : vector<2x4x32xf32> to vector<4x32xf32>
    %69 = arith.mulf %55, %55 : vector<2x4x32xf32>
    %cst_41 = arith.constant dense<0.000000e+00> : vector<4x32xf32>
    %70 = vector.multi_reduction <add>, %69, %cst_41 [0] : vector<2x4x32xf32> to vector<4x32xf32>
    %cst_42 = arith.constant 5.000000e-01 : f32
    %71 = vector.broadcast %cst_42 : f32 to vector<4x32xf32>
    %72 = arith.mulf %68, %71 : vector<4x32xf32>
    %cst_43 = arith.constant 5.000000e-01 : f32
    %73 = vector.broadcast %cst_43 : f32 to vector<4x4x32xf32>
    %74 = arith.mulf %67, %73 : vector<4x4x32xf32>
    %75 = vector.shape_cast %72 : vector<4x32xf32> to vector<4x1x32xf32>
    %76 = vector.shape_cast %72 : vector<4x32xf32> to vector<1x4x32xf32>
    %77 = vector.broadcast %75 : vector<4x1x32xf32> to vector<4x4x32xf32>
    %78 = vector.broadcast %76 : vector<1x4x32xf32> to vector<4x4x32xf32>
    %79 = arith.mulf %77, %78 : vector<4x4x32xf32>
    %80 = arith.subf %74, %79 : vector<4x4x32xf32>
    %cst_44 = arith.constant 5.000000e-01 : f32
    %81 = vector.broadcast %cst_44 : f32 to vector<4x32xf32>
    %82 = arith.mulf %70, %81 : vector<4x32xf32>
    %83 = arith.mulf %72, %72 : vector<4x32xf32>
    %84 = arith.subf %82, %83 : vector<4x32xf32>
    %85 = arith.mulf %80, %80 : vector<4x4x32xf32>
    %86 = vector.shape_cast %85 : vector<4x4x32xf32> to vector<1x4x4x32xf32>
    %cst_45 = arith.constant dense<0.000000e+00> : vector<1xf32>
    %87 = vector.multi_reduction <add>, %86, %cst_45 [1, 2, 3] : vector<1x4x4x32xf32> to vector<1xf32>
    %88 = vector.shape_cast %87 : vector<1xf32> to vector<1x1x1x1xf32>
    %89 = vector.extract %88[0, 0, 0, 0] : f32 from vector<1x1x1x1xf32>
    %90 = arith.mulf %84, %84 : vector<4x32xf32>
    %91 = vector.shape_cast %90 : vector<4x32xf32> to vector<1x4x32xf32>
    %cst_46 = arith.constant dense<0.000000e+00> : vector<1xf32>
    %92 = vector.multi_reduction <add>, %91, %cst_46 [1, 2] : vector<1x4x32xf32> to vector<1xf32>
    %93 = vector.shape_cast %92 : vector<1xf32> to vector<1x1x1xf32>
    %94 = vector.extract %93[0, 0, 0] : f32 from vector<1x1x1xf32>
    %95 = arith.subf %89, %94 : f32
    %96 = vector.shape_cast %57 : vector<2x4x64xf32> to vector<2x4x1x64xf32>
    %97 = vector.shape_cast %57 : vector<2x4x64xf32> to vector<2x1x4x64xf32>
    %98 = vector.broadcast %96 : vector<2x4x1x64xf32> to vector<2x4x4x64xf32>
    %99 = vector.broadcast %97 : vector<2x1x4x64xf32> to vector<2x4x4x64xf32>
    %100 = arith.mulf %98, %99 : vector<2x4x4x64xf32>
    %cst_47 = arith.constant dense<0.000000e+00> : vector<4x4x64xf32>
    %101 = vector.multi_reduction <add>, %100, %cst_47 [0] : vector<2x4x4x64xf32> to vector<4x4x64xf32>
    %cst_48 = arith.constant dense<0.000000e+00> : vector<4x64xf32>
    %102 = vector.multi_reduction <add>, %57, %cst_48 [0] : vector<2x4x64xf32> to vector<4x64xf32>
    %103 = arith.mulf %57, %57 : vector<2x4x64xf32>
    %cst_49 = arith.constant dense<0.000000e+00> : vector<4x64xf32>
    %104 = vector.multi_reduction <add>, %103, %cst_49 [0] : vector<2x4x64xf32> to vector<4x64xf32>
    %cst_50 = arith.constant 5.000000e-01 : f32
    %105 = vector.broadcast %cst_50 : f32 to vector<4x64xf32>
    %106 = arith.mulf %102, %105 : vector<4x64xf32>
    %cst_51 = arith.constant 5.000000e-01 : f32
    %107 = vector.broadcast %cst_51 : f32 to vector<4x4x64xf32>
    %108 = arith.mulf %101, %107 : vector<4x4x64xf32>
    %109 = vector.shape_cast %106 : vector<4x64xf32> to vector<4x1x64xf32>
    %110 = vector.shape_cast %106 : vector<4x64xf32> to vector<1x4x64xf32>
    %111 = vector.broadcast %109 : vector<4x1x64xf32> to vector<4x4x64xf32>
    %112 = vector.broadcast %110 : vector<1x4x64xf32> to vector<4x4x64xf32>
    %113 = arith.mulf %111, %112 : vector<4x4x64xf32>
    %114 = arith.subf %108, %113 : vector<4x4x64xf32>
    %cst_52 = arith.constant 5.000000e-01 : f32
    %115 = vector.broadcast %cst_52 : f32 to vector<4x64xf32>
    %116 = arith.mulf %104, %115 : vector<4x64xf32>
    %117 = arith.mulf %106, %106 : vector<4x64xf32>
    %118 = arith.subf %116, %117 : vector<4x64xf32>
    %119 = arith.mulf %114, %114 : vector<4x4x64xf32>
    %120 = vector.shape_cast %119 : vector<4x4x64xf32> to vector<1x4x4x64xf32>
    %cst_53 = arith.constant dense<0.000000e+00> : vector<1xf32>
    %121 = vector.multi_reduction <add>, %120, %cst_53 [1, 2, 3] : vector<1x4x4x64xf32> to vector<1xf32>
    %122 = vector.shape_cast %121 : vector<1xf32> to vector<1x1x1x1xf32>
    %123 = vector.extract %122[0, 0, 0, 0] : f32 from vector<1x1x1x1xf32>
    %124 = arith.mulf %118, %118 : vector<4x64xf32>
    %125 = vector.shape_cast %124 : vector<4x64xf32> to vector<1x4x64xf32>
    %cst_54 = arith.constant dense<0.000000e+00> : vector<1xf32>
    %126 = vector.multi_reduction <add>, %125, %cst_54 [1, 2] : vector<1x4x64xf32> to vector<1xf32>
    %127 = vector.shape_cast %126 : vector<1xf32> to vector<1x1x1xf32>
    %128 = vector.extract %127[0, 0, 0] : f32 from vector<1x1x1xf32>
    %129 = arith.subf %123, %128 : f32
    %130 = arith.addf %95, %129 : f32
    %131 = vector.broadcast %130 : f32 to vector<1x1xf32>
    %c0_55 = arith.constant 0 : index
    %c0_56 = arith.constant 0 : index
    %132 = vector.load %arg9[%c0_55, %c0_56] : memref<1x1xf32, #tpu.memory_space<vmem>>, vector<1x1xf32>
    tpu.vector_store %arg9[%c0_55, %c0_56], %131 {strides = array<i32>} : memref<1x1xf32, #tpu.memory_space<vmem>>, vector<1x1xf32>,
    return
  }
}

</mosaic_0001>

<llo_original>
// kernel: mpnr_scores.1
$region0: #{mpnr_scores.1}
  #allocation0 [shape = 'u32[]', space=smem, size = 0x4, offset = 0x4, fixed_abs, tag = 'smem constant byte address 0x4 - core index']
  #allocation1 [shape = 'u32[144,128]{1,0:T(1,128)}', space=vmem, size = 0x12000, scoped, tag = 'internal scratch']
  %s0 = inlined_call_operand.vmem [shape: f32[2,4,32], index: 0, kind: input, shape index: {}]
  %s1 = inlined_call_operand.vmem [shape: f32[2,6,32], index: 1, kind: input, shape index: {}]
  %s2 = inlined_call_operand.vmem [shape: f32[8,16], index: 2, kind: input, shape index: {}]
  %s3 = inlined_call_operand.vmem [shape: f32[12,16], index: 3, kind: input, shape index: {}]
  %s4 = inlined_call_operand.vmem [shape: f32[2,6], index: 4, kind: input, shape index: {}]
  %s5 = inlined_call_operand.vmem [shape: f32[2,4,32], index: 5, kind: input, shape index: {}]
  %s6 = inlined_call_operand.vmem [shape: f32[2,4,64], index: 6, kind: input, shape index: {}]
  %s7 = inlined_call_operand.vmem [shape: f32[40,64], index: 7, kind: input, shape index: {}]
  %s8 = inlined_call_operand.hbm [shape: f32[2,1,4], index: 8, kind: output, shape index: {0}]
  %s9 = inlined_call_operand.hbm [shape: f32[1,1], index: 9, kind: output, shape index: {1}]
  %10 = xla_tuple %s8, %s9
  %s11 = sld [smem:[#allocation0]]
  $region50: #{mpnr_scores.1} parent=0
    _
  %s13 = ssub.s32 1, %s11
  %s14 = scalar_select 0, %s13, %s11
  $region1: #{mpnr_scores.1} parent=0
    #allocation2 [shape = 'u8[1024]{0}', space=vmem, size = 0x400, scoped, tag = 'output window, operand 0, single buffered']
    #allocation3 [shape = 's32[1]{0}', space=sflag, size = 0x4, scoped, tag = 'scoped memory for mpnr_scores.1']
    #allocation4 [shape = 'u8[512]{0}', space=vmem, size = 0x400, scoped, tag = 'output window, operand 1, single buffered']
    #allocation5 [shape = 's32[1]{0}', space=sflag, size = 0x4, scoped, tag = 'scoped memory for mpnr_scores.1']
    %15 = vsyncpa [#allocation3], 0
    %16 = vsyncpa [#allocation5], 0
    // Predicated region
    $region2: #{mpnr_scores.1} parent=1 // pred_check
      _
    $region3: #{mpnr_scores.1} parent=1 // pred_check_branch
      %18 = sbr.rel (0) target = $region5
    $region4: #{mpnr_scores.1} parent=1 // pred_region
      _
    $region5: #{mpnr_scores.1} parent=1 // pred_fallthru
      _
    // Predicated region
    $region6: #{mpnr_scores.1} parent=1 // pred_check
      _
    $region7: #{mpnr_scores.1} parent=1 // pred_check_branch
      %20 = sbr.rel (0) target = $region9
    $region8: #{mpnr_scores.1} parent=1 // pred_region
      _
    $region9: #{mpnr_scores.1} parent=1 // pred_fallthru
      _
    // Predicated region
    $region10: #{mpnr_scores.1} parent=1 // pred_check
      _
    $region11: #{mpnr_scores.1} parent=1 // pred_check_branch
      %22 = sbr.rel (0) target = $region13
    $region12: #{mpnr_scores.1} parent=1 // pred_region
      _
    $region13: #{mpnr_scores.1} parent=1 // pred_fallthru
      _
    // Predicated region
    $region14: #{mpnr_scores.1} parent=1 // pred_check
      _
    $region15: #{mpnr_scores.1} parent=1 // pred_check_branch
      %24 = sbr.rel (0) target = $region17
    $region16: #{mpnr_scores.1} parent=1 // pred_region
      _
    $region17: #{mpnr_scores.1} parent=1 // pred_fallthru
      _
    // Predicated region
    $region18: #{mpnr_scores.1} parent=1 // pred_check
      _
    $region19: #{mpnr_scores.1} parent=1 // pred_check_branch
      %26 = sbr.rel (0) target = $region21
    $region20: #{mpnr_scores.1} parent=1 // pred_region
      _
    $region21: #{mpnr_scores.1} parent=1 // pred_fallthru
      _
    // Predicated region
    $region22: #{mpnr_scores.1} parent=1 // pred_check
      _
    $region23: #{mpnr_scores.1} parent=1 // pred_check_branch
      %28 = sbr.rel (0) target = $region25
    $region24: #{mpnr_scores.1} parent=1 // pred_region
      _
    $region25: #{mpnr_scores.1} parent=1 // pred_fallthru
      _
    // Predicated region
    $region26: #{mpnr_scores.1} parent=1 // pred_check
      _
    $region27: #{mpnr_scores.1} parent=1 // pred_check_branch
      %30 = sbr.rel (0) target = $region29
    $region28: #{mpnr_scores.1} parent=1 // pred_region
      _
    $region29: #{mpnr_scores.1} parent=1 // pred_fallthru
      _
    // Predicated region
    $region30: #{mpnr_scores.1} parent=1 // pred_check
      _
    $region31: #{mpnr_scores.1} parent=1 // pred_check_branch
      %32 = sbr.rel (0) target = $region33
    $region32: #{mpnr_scores.1} parent=1 // pred_region
      _
    $region33: #{mpnr_scores.1} parent=1 // pred_fallthru
      _
    %v33 = vld [vmem:[%s0] sm:$0xf]
    %v34 = vld [vmem:[%s0 + $0x4] sm:$0xf]
    %v35 = vld [vmem:[%s1] sm:$0x3f]
    %v36 = vld [vmem:[%s1 + $0x8] sm:$0x3f]
    %v37 = vld [vmem:[%s4] sm:$0x3]
    %vm38 = vcmp.gt.f32.partialorder %v37, 0.5
    %v39 = vsel %vm38, 1, 0
    %v41 = vunpack.c.l.s4 1966171168
    %v42 = vunpack.c.0.s8 %v41
    %v43 = vlaneseq
    %v44 = vshrl.u32 %v43, 7
    %v45 = vsub.s32 %v42, %v44
    %v46 = vrot.slane %v39, %v45
    %v47 = vcombine.high %v46, %v46
    %v49 = vunpack.c.l.s4 1966171168
    %v50 = vunpack.c.0.s8 %v49
    %v51 = vlaneseq
    %v52 = vshrl.u32 %v51, 7
    %v53 = vsub.s32 %v50, %v52
    %v54 = vrot.slane %v46, %v53
    %v56 = vunpack.c.l.s4 1966171168
    %v57 = vunpack.c.0.s8 %v56
    %v58 = vlaneseq
    %v59 = vshrl.u32 %v58, 7
    %v60 = vsub.s32 %v57, %v59
    %v61 = vrot.slane %v47, %v60
    %vm62 = vcmp.ne.s32.totalorder %v54, 0
    %vm63 = vcmp.ne.s32.totalorder %v61, 0
    %v64 = vld [vmem:[%s7] sm:$0xff]
    %v65 = vld [vmem:[%s7 + $0x8] sm:$0xff]
    %v66 = vld [vmem:[%s7 + $0x10] sm:$0x1]
    %v67 = vld [vmem:[%s7 + $0x18] sm:$0x1]
    %v68 = vld [vmem:[%s7 + $0x20] sm:$0x1]
    %v69 = vld [vmem:[%s2] sm:$0xff]
    %v70 = vlaneseq
    %v71 = vshrl.u32 %v70, 7
    %v72 = vsub.s32 0, %v71
    %v73 = vrot.slane %v66, %v72
    %vm74 = vcmask 130048
    %v76 = vsel %vm74, %v69, 0
    %78 = vmatprep.subr.mxu0 0.0
    %79 = vmatpush1.msra.mxu0 %v64
    %80 = vmatprep.subr.mxu0 0.0
    %81 = vmatpush1.msra.mxu0 %v65
    %82 = vmatprep.subr.mxu0 0.0
    %83 = vmatpush1.msra.mxu0 0.0
    %84 = vmatprep.subr.mxu0 0.0
    %85 = vmatpush1.msra.mxu0 0.0
    %86 = vmatprep.subr.mxu0 0.0
    %87 = vmatpush1.msra.mxu0 0.0
    %88 = vmatprep.subr.mxu0 0.0
    %89 = vmatpush1.msra.mxu0 0.0
    %90 = vmatprep.subr.mxu0 0.0
    %91 = vmatpush1.msra.mxu0 0.0
    %92 = vmatprep.subr.mxu0 0.0
    %93 = vmatpush1.msra.mxu0 0.0
    %94 = vmatprep.subr.mxu0 0.0
    %95 = vmatpush1.msra.mxu0 0.0
    %96 = vmatprep.subr.mxu0 0.0
    %97 = vmatpush1.msra.mxu0 0.0
    %98 = vmatprep.subr.mxu0 0.0
    %99 = vmatpush1.msra.mxu0 0.0
    %100 = vmatprep.subr.mxu0 0.0
    %101 = vmatpush1.msra.mxu0 0.0
    %102 = vmatprep.subr.mxu0 0.0
    %103 = vmatpush1.msra.mxu0 0.0
    %104 = vmatprep.subr.mxu0 0.0
    %105 = vmatpush1.msra.mxu0 0.0
    %106 = vmatprep.subr.mxu0 0.0
    %107 = vmatpush1.msra.mxu0 0.0
    %108 = vmatprep.subr.mxu0 0.0
    %109 = vmatpush1.msra.mxu0 0.0
    %110 = vmatprep.subr.mxu0 0.0
    %111 = vmatpush1.msra.mxu0 0.0
    %112 = vmatprep.subr.mxu0 0.0
    %113 = vmatpush1.msra.mxu0 0.0
    %114 = vmatprep.subr.mxu0 0.0
    %115 = vmatpush1.msra.mxu0 0.0
    %116 = vmatprep.subr.mxu0 0.0
    %117 = vmatpush1.msra.mxu0 0.0
    %118 = vmatprep.subr.mxu0 0.0
    %119 = vmatpush1.msra.mxu0 0.0
    %120 = vmatprep.subr.mxu0 0.0
    %121 = vmatpush1.msra.mxu0 0.0
    %122 = vmatprep.subr.mxu0 0.0
    %123 = vmatpush1.msra.mxu0 0.0
    %124 = vmatprep.subr.mxu0 0.0
    %125 = vmatpush1.msra.mxu0 0.0
    %126 = vmatprep.subr.mxu0 0.0
    %127 = vmatpush1.msra.mxu0 0.0
    %128 = vmatprep.subr.mxu0 0.0
    %129 = vmatpush1.msra.mxu0 0.0
    %130 = vmatprep.subr.mxu0 0.0
    %131 = vmatpush1.msra.mxu0 0.0
    %132 = vmatprep.subr.mxu0 0.0
    %133 = vmatpush1.msra.mxu0 0.0
    %134 = vmatprep.subr.mxu0 0.0
    %135 = vmatpush1.msra.mxu0 0.0
    %136 = vmatprep.subr.mxu0 0.0
    %137 = vmatpush1.msra.mxu0 0.0
    %138 = vmatprep.subr.mxu0 0.0
    %139 = vmatpush1.msra.mxu0 0.0
    %140 = vmatprep.subr.mxu0 0.0
    %141 = vmatpush1.msra.mxu0 0.0
    %142 = vmatprep.mubr.f32.mxu0 0.0
    %143 = vmatmul.mubr.f32.gmra.mrb[0].mxu0 %v76
    %v144 = vpop.f32.mrb[0].mxu0
    %v145 = vadd.f32 %v73, %v144
    %v146 = vpop.f32.mrb[0].mxu0
    %147 = vdwg.mxu0
    %v149 = vcombine.high %v145, %v145
    %v151 = vld [vmem:[%s3] sm:$0xff]
    %v152 = vld [vmem:[%s3 + $0x8] sm:$0xf]
    %v154 = vsel %vm74, %v151, 0
    %v157 = vsel %vm74, %v152, 0
    %159 = vmatprep.subr.mxu0 0.0
    %160 = vmatpush1.msra.mxu0 %v64
    %161 = vmatprep.subr.mxu0 0.0
    %162 = vmatpush1.msra.mxu0 %v65
    %163 = vmatprep.subr.mxu0 0.0
    %164 = vmatpush1.msra.mxu0 0.0
    %165 = vmatprep.subr.mxu0 0.0
    %166 = vmatpush1.msra.mxu0 0.0
    %167 = vmatprep.subr.mxu0 0.0
    %168 = vmatpush1.msra.mxu0 0.0
    %169 = vmatprep.subr.mxu0 0.0
    %170 = vmatpush1.msra.mxu0 0.0
    %171 = vmatprep.subr.mxu0 0.0
    %172 = vmatpush1.msra.mxu0 0.0
    %173 = vmatprep.subr.mxu0 0.0
    %174 = vmatpush1.msra.mxu0 0.0
    %175 = vmatprep.subr.mxu0 0.0
    %176 = vmatpush1.msra.mxu0 0.0
    %177 = vmatprep.subr.mxu0 0.0
    %178 = vmatpush1.msra.mxu0 0.0
    %179 = vmatprep.subr.mxu0 0.0
    %180 = vmatpush1.msra.mxu0 0.0
    %181 = vmatprep.subr.mxu0 0.0
    %182 = vmatpush1.msra.mxu0 0.0
    %183 = vmatprep.subr.mxu0 0.0
    %184 = vmatpush1.msra.mxu0 0.0
    %185 = vmatprep.subr.mxu0 0.0
    %186 = vmatpush1.msra.mxu0 0.0
    %187 = vmatprep.subr.mxu0 0.0
    %188 = vmatpush1.msra.mxu0 0.0
    %189 = vmatprep.subr.mxu0 0.0
    %190 = vmatpush1.msra.mxu0 0.0
    %191 = vmatprep.subr.mxu0 0.0
    %192 = vmatpush1.msra.mxu0 0.0
    %193 = vmatprep.subr.mxu0 0.0
    %194 = vmatpush1.msra.mxu0 0.0
    %195 = vmatprep.subr.mxu0 0.0
    %196 = vmatpush1.msra.mxu0 0.0
    %197 = vmatprep.subr.mxu0 0.0
    %198 = vmatpush1.msra.mxu0 0.0
    %199 = vmatprep.subr.mxu0 0.0
    %200 = vmatpush1.msra.mxu0 0.0
    %201 = vmatprep.subr.mxu0 0.0
    %202 = vmatpush1.msra.mxu0 0.0
    %203 = vmatprep.subr.mxu0 0.0
    %204 = vmatpush1.msra.mxu0 0.0
    %205 = vmatprep.subr.mxu0 0.0
    %206 = vmatpush1.msra.mxu0 0.0
    %207 = vmatprep.subr.mxu0 0.0
    %208 = vmatpush1.msra.mxu0 0.0
    %209 = vmatprep.subr.mxu0 0.0
    %210 = vmatpush1.msra.mxu0 0.0
    %211 = vmatprep.subr.mxu0 0.0
    %212 = vmatpush1.msra.mxu0 0.0
    %213 = vmatprep.subr.mxu0 0.0
    %214 = vmatpush1.msra.mxu0 0.0
    %215 = vmatprep.subr.mxu0 0.0
    %216 = vmatpush1.msra.mxu0 0.0
    %217 = vmatprep.subr.mxu0 0.0
    %218 = vmatpush1.msra.mxu0 0.0
    %219 = vmatprep.subr.mxu0 0.0
    %220 = vmatpush1.msra.mxu0 0.0
    %221 = vmatprep.subr.mxu0 0.0
    %222 = vmatpush1.msra.mxu0 0.0
    %223 = vmatprep.mubr.f32.mxu0 0.0
    %224 = vmatmul.mubr.f32.gmra.mrb[0].mxu0 %v154
    %v225 = vpop.f32.mrb[0].mxu0
    %v226 = vadd.f32 %v73, %v225
    %v227 = vpop.f32.mrb[0].mxu0
    %228 = vmatprep.mubr.f32.mxu0 0.0
    %229 = vmatmul.mubr.f32.gmra.mrb[0].mxu0 %v157
    %v230 = vpop.f32.mrb[0].mxu0
    %v231 = vadd.f32 %v73, %v230
    %v232 = vpop.f32.mrb[0].mxu0
    %233 = vdwg.mxu0
    %v236 = vcombine.high %v226, %v226
    %v238 = vunpack.c.l.s4 1983009808
    %v239 = vunpack.c.0.s8 %v238
    %v240 = vlaneseq
    %v241 = vshrl.u32 %v240, 7
    %v242 = vsub.s32 %v239, %v241
    %v243 = vrot.slane %v226, %v242
    %v245 = vunpack.c.l.s4 1983009808
    %v246 = vunpack.c.0.s8 %v245
    %v247 = vlaneseq
    %v248 = vshrl.u32 %v247, 7
    %v249 = vsub.s32 %v246, %v248
    %v250 = vrot.slane %v236, %v249
    %v251 = vcombine.high %v243, %v243
    %v252 = vcombine.high %v250, %v250
    %v254 = vunpack.c.l.s4 1983009808
    %v255 = vunpack.c.0.s8 %v254
    %v256 = vlaneseq
    %v257 = vshrl.u32 %v256, 7
    %v258 = vsub.s32 %v255, %v257
    %v259 = vrot.slane %v231, %v258
    %v260 = vcombine.high %v259, %v259
    %v267 = vlaneseq
    %v268 = vshrl.u32 %v267, 7
    %v269 = vsub.s32 0, %v268
    %v270 = vrot.slane %v68, %v269
    %v271 = vmul.f32 %v35, %v270
    %v272 = vmul.f32 %v36, %v270
    %vm273 = vcmask 259072
    %v274 = vsel %vm273, %v271, 0.0
    %275 = vadd.xlane.f32.xlu0 %v274
    %v276 = vpop.xlane.xlu0 %275
    %v277 = vsel %vm273, %v272, 0.0
    %278 = vadd.xlane.f32.xlu0 %v277
    %v279 = vpop.xlane.xlu0 %278
    %v282 = vlaneseq
    %v283 = vshrl.u32 %v282, 7
    %v284 = vsub.s32 0, %v283
    %v285 = vrot.slane %v276, %v284
    %v286 = vlaneseq
    %v287 = vshrl.u32 %v286, 7
    %v288 = vsub.s32 1, %v287
    %v289 = vrot.slane %v276, %v288
    %v290 = vlaneseq
    %v291 = vshrl.u32 %v290, 7
    %v292 = vsub.s32 2, %v291
    %v293 = vrot.slane %v276, %v292
    %v294 = vlaneseq
    %v295 = vshrl.u32 %v294, 7
    %v296 = vsub.s32 3, %v295
    %v297 = vrot.slane %v276, %v296
    %v298 = vlaneseq
    %v299 = vshrl.u32 %v298, 7
    %v300 = vsub.s32 4, %v299
    %v301 = vrot.slane %v276, %v300
    %v302 = vlaneseq
    %v303 = vshrl.u32 %v302, 7
    %v304 = vsub.s32 5, %v303
    %v305 = vrot.slane %v276, %v304
    %v306 = vlaneseq
    %v307 = vshrl.u32 %v306, 7
    %v308 = vsub.s32 0, %v307
    %v309 = vrot.slane %v279, %v308
    %v310 = vlaneseq
    %v311 = vshrl.u32 %v310, 7
    %v312 = vsub.s32 1, %v311
    %v313 = vrot.slane %v279, %v312
    %v314 = vlaneseq
    %v315 = vshrl.u32 %v314, 7
    %v316 = vsub.s32 2, %v315
    %v317 = vrot.slane %v279, %v316
    %v318 = vlaneseq
    %v319 = vshrl.u32 %v318, 7
    %v320 = vsub.s32 3, %v319
    %v321 = vrot.slane %v279, %v320
    %v322 = vlaneseq
    %v323 = vshrl.u32 %v322, 7
    %v324 = vsub.s32 4, %v323
    %v325 = vrot.slane %v279, %v324
    %v326 = vlaneseq
    %v327 = vshrl.u32 %v326, 7
    %v328 = vsub.s32 5, %v327
    %v329 = vrot.slane %v279, %v328
    %v330 = vcombine.low %v285, %v289
    %v331 = vcombine.low %v293, %v297
    %v332 = vcombine.low %v301, %v305
    %v334 = vunpack.c.l.s4 1966171168
    %v335 = vunpack.c.0.s8 %v334
    %v336 = vlaneseq
    %v337 = vshrl.u32 %v336, 7
    %v338 = vsub.s32 %v335, %v337
    %v339 = vrot.slane %v330, %v338
    %v341 = vunpack.c.l.s4 1966171168
    %v342 = vunpack.c.0.s8 %v341
    %v343 = vlaneseq
    %v344 = vshrl.u32 %v343, 7
    %v345 = vsub.s32 %v342, %v344
    %v346 = vrot.slane %v331, %v345
    %v348 = vunpack.c.l.s4 1966171168
    %v349 = vunpack.c.0.s8 %v348
    %v350 = vlaneseq
    %v351 = vshrl.u32 %v350, 7
    %v352 = vsub.s32 %v349, %v351
    %v353 = vrot.slane %v332, %v352
    %v354 = vcombine.low %v339, %v346
    %v356 = vunpack.c.l.s4 1966171168
    %v357 = vunpack.c.0.s8 %v356
    %v358 = vlaneseq
    %v359 = vshrl.u32 %v358, 7
    %v360 = vsub.s32 %v357, %v359
    %v361 = vrot.slane %v354, %v360
    %v363 = vunpack.c.l.s4 1966171168
    %v364 = vunpack.c.0.s8 %v363
    %v365 = vlaneseq
    %v366 = vshrl.u32 %v365, 7
    %v367 = vsub.s32 %v364, %v366
    %v368 = vrot.slane %v353, %v367
    %v369 = vcombine.low %v361, %v368
    %v370 = vcombine.low %v309, %v313
    %v371 = vcombine.low %v317, %v321
    %v372 = vcombine.low %v325, %v329
    %v374 = vunpack.c.l.s4 1966171168
    %v375 = vunpack.c.0.s8 %v374
    %v376 = vlaneseq
    %v377 = vshrl.u32 %v376, 7
    %v378 = vsub.s32 %v375, %v377
    %v379 = vrot.slane %v370, %v378
    %v381 = vunpack.c.l.s4 1966171168
    %v382 = vunpack.c.0.s8 %v381
    %v383 = vlaneseq
    %v384 = vshrl.u32 %v383, 7
    %v385 = vsub.s32 %v382, %v384
    %v386 = vrot.slane %v371, %v385
    %v388 = vunpack.c.l.s4 1966171168
    %v389 = vunpack.c.0.s8 %v388
    %v390 = vlaneseq
    %v391 = vshrl.u32 %v390, 7
    %v392 = vsub.s32 %v389, %v391
    %v393 = vrot.slane %v372, %v392
    %v394 = vcombine.low %v379, %v386
    %v396 = vunpack.c.l.s4 1966171168
    %v397 = vunpack.c.0.s8 %v396
    %v398 = vlaneseq
    %v399 = vshrl.u32 %v398, 7
    %v400 = vsub.s32 %v397, %v399
    %v401 = vrot.slane %v394, %v400
    %v403 = vunpack.c.l.s4 1966171168
    %v404 = vunpack.c.0.s8 %v403
    %v405 = vlaneseq
    %v406 = vshrl.u32 %v405, 7
    %v407 = vsub.s32 %v404, %v406
    %v408 = vrot.slane %v393, %v407
    %v409 = vcombine.low %v401, %v408
    %410 = vset.pattern.permute.xlu0 0
    %411 = vperm.xlu0 %410, %v369
    %v412 = vpop.permute.xlu0 %411
    %413 = vset.pattern.permute.xlu0 0
    %414 = vperm.xlu0 %413, %v409
    %v415 = vpop.permute.xlu0 %414
    %v416 = vlaneseq
    %v417 = vand.u32 %v416, 127
    %v418 = vlaneseq
    %v419 = vshrl.u32 %v418, 7
    %v420 = vsub.s32 %v417, %v419
    %v421 = vrot.slane %v412, %v420
    %v422 = vlaneseq
    %v423 = vshrl.u32 %v422, 7
    %v424 = vsub.s32 %v417, %v423
    %v425 = vrot.slane %v415, %v424
    %v427 = vunpack.c.l.s4 1966171168
    %v428 = vunpack.c.0.s8 %v427
    %v429 = vlaneseq
    %v430 = vshrl.u32 %v429, 7
    %v431 = vsub.s32 %v428, %v430
    %v432 = vrot.slane %v421, %v431
    %v434 = vunpack.c.l.s4 1966171168
    %v435 = vunpack.c.0.s8 %v434
    %v436 = vlaneseq
    %v437 = vshrl.u32 %v436, 7
    %v438 = vsub.s32 %v435, %v437
    %v439 = vrot.slane %v432, %v438
    %v441 = vunpack.c.l.s4 1966171168
    %v442 = vunpack.c.0.s8 %v441
    %v443 = vlaneseq
    %v444 = vshrl.u32 %v443, 7
    %v445 = vsub.s32 %v442, %v444
    %v446 = vrot.slane %v425, %v445
    %v448 = vunpack.c.l.s4 1966171168
    %v449 = vunpack.c.0.s8 %v448
    %v450 = vlaneseq
    %v451 = vshrl.u32 %v450, 7
    %v452 = vsub.s32 %v449, %v451
    %v453 = vrot.slane %v446, %v452
    %v456 = vsel %vm62, %v439, 1e-30
    %v457 = vsel %vm63, %v453, 1e-30
    %vm458 = vcmask 40960
    %v459 = vsel %vm458, %v456, -inf
    %460 = vmax.xlane.f32.xlu0 %v459
    %v461 = vpop.xlane.xlu0 %460
    %v462 = vsel %vm458, %v457, -inf
    %463 = vmax.xlane.f32.xlu0 %v462
    %v464 = vpop.xlane.xlu0 %463
    %v465 = vsub.f32 %v456, %v461
    %v466 = vsub.f32 %v457, %v464
    %v467 = vmul.f32 %v465, 1.442695
    %v468 = vpow.pop %v467
    %v469 = vmul.f32 %v466, 1.442695
    %v470 = vpow.pop %v469
    %v471 = vsel %vm458, %v468, 0.0
    %472 = vadd.xlane.f32.xlu0 %v471
    %v473 = vpop.xlane.xlu0 %472
    %v474 = vsel %vm458, %v470, 0.0
    %475 = vadd.xlane.f32.xlu0 %v474
    %v476 = vpop.xlane.xlu0 %475
    %v477 = vrcp.pop %v473
    %v478 = vmul.f32 %v468, %v477
    %v479 = vrcp.pop %v476
    %v480 = vmul.f32 %v470, %v479
    %vm481 = vcmask 48128
    %v483 = vsel %vm481, %v478, 0
    %vm485 = vcmask 1045504
    %v487 = vsel %vm485, %v35, 0
    %489 = vmatprep.subr.mxu0 0.0
    %490 = vmatpush1.msra.mxu0 %v487
    %491 = vmatprep.subr.mxu0 0.0
    %492 = vmatpush1.msra.mxu0 0.0
    %493 = vmatprep.subr.mxu0 0.0
    %494 = vmatpush1.msra.mxu0 0.0
    %495 = vmatprep.subr.mxu0 0.0
    %496 = vmatpush1.msra.mxu0 0.0
    %497 = vmatprep.subr.mxu0 0.0
    %498 = vmatpush1.msra.mxu0 0.0
    %499 = vmatprep.subr.mxu0 0.0
    %500 = vmatpush1.msra.mxu0 0.0
    %501 = vmatprep.subr.mxu0 0.0
    %502 = vmatpush1.msra.mxu0 0.0
    %503 = vmatprep.subr.mxu0 0.0
    %504 = vmatpush1.msra.mxu0 0.0
    %505 = vmatprep.subr.mxu0 0.0
    %506 = vmatpush1.msra.mxu0 0.0
    %507 = vmatprep.subr.mxu0 0.0
    %508 = vmatpush1.msra.mxu0 0.0
    %509 = vmatprep.subr.mxu0 0.0
    %510 = vmatpush1.msra.mxu0 0.0
    %511 = vmatprep.subr.mxu0 0.0
    %512 = vmatpush1.msra.mxu0 0.0
    %513 = vmatprep.subr.mxu0 0.0
    %514 = vmatpush1.msra.mxu0 0.0
    %515 = vmatprep.subr.mxu0 0.0
    %516 = vmatpush1.msra.mxu0 0.0
    %517 = vmatprep.subr.mxu0 0.0
    %518 = vmatpush1.msra.mxu0 0.0
    %519 = vmatprep.subr.mxu0 0.0
    %520 = vmatpush1.msra.mxu0 0.0
    %521 = vmatprep.subr.mxu0 0.0
    %522 = vmatpush1.msra.mxu0 0.0
    %523 = vmatprep.subr.mxu0 0.0
    %524 = vmatpush1.msra.mxu0 0.0
    %525 = vmatprep.subr.mxu0 0.0
    %526 = vmatpush1.msra.mxu0 0.0
    %527 = vmatprep.subr.mxu0 0.0
    %528 = vmatpush1.msra.mxu0 0.0
    %529 = vmatprep.subr.mxu0 0.0
    %530 = vmatpush1.msra.mxu0 0.0
    %531 = vmatprep.subr.mxu0 0.0
    %532 = vmatpush1.msra.mxu0 0.0
    %533 = vmatprep.subr.mxu0 0.0
    %534 = vmatpush1.msra.mxu0 0.0
    %535 = vmatprep.subr.mxu0 0.0
    %536 = vmatpush1.msra.mxu0 0.0
    %537 = vmatprep.subr.mxu0 0.0
    %538 = vmatpush1.msra.mxu0 0.0
    %539 = vmatprep.subr.mxu0 0.0
    %540 = vmatpush1.msra.mxu0 0.0
    %541 = vmatprep.subr.mxu0 0.0
    %542 = vmatpush1.msra.mxu0 0.0
    %543 = vmatprep.subr.mxu0 0.0
    %544 = vmatpush1.msra.mxu0 0.0
    %545 = vmatprep.subr.mxu0 0.0
    %546 = vmatpush1.msra.mxu0 0.0
    %547 = vmatprep.subr.mxu0 0.0
    %548 = vmatpush1.msra.mxu0 0.0
    %549 = vmatprep.subr.mxu0 0.0
    %550 = vmatpush1.msra.mxu0 0.0
    %551 = vmatprep.subr.mxu0 0.0
    %552 = vmatpush1.msra.mxu0 0.0
    %553 = vmatprep.mubr.f32.mxu0 0.0
    %554 = vmatmul.mubr.f32.gmra.mrb[0].mxu0 %v483
    %v555 = vpop.f32.mrb[0].mxu0
    %v556 = vadd.f32 0.0, %v555
    %v557 = vpop.f32.mrb[0].mxu0
    %558 = vdwg.mxu0
    %v560 = vsel %vm481, %v480, 0
    %v563 = vsel %vm485, %v36, 0
    %565 = vmatprep.subr.mxu0 0.0
    %566 = vmatpush1.msra.mxu0 %v563
    %567 = vmatprep.subr.mxu0 0.0
    %568 = vmatpush1.msra.mxu0 0.0
    %569 = vmatprep.subr.mxu0 0.0
    %570 = vmatpush1.msra.mxu0 0.0
    %571 = vmatprep.subr.mxu0 0.0
    %572 = vmatpush1.msra.mxu0 0.0
    %573 = vmatprep.subr.mxu0 0.0
    %574 = vmatpush1.msra.mxu0 0.0
    %575 = vmatprep.subr.mxu0 0.0
    %576 = vmatpush1.msra.mxu0 0.0
    %577 = vmatprep.subr.mxu0 0.0
    %578 = vmatpush1.msra.mxu0 0.0
    %579 = vmatprep.subr.mxu0 0.0
    %580 = vmatpush1.msra.mxu0 0.0
    %581 = vmatprep.subr.mxu0 0.0
    %582 = vmatpush1.msra.mxu0 0.0
    %583 = vmatprep.subr.mxu0 0.0
    %584 = vmatpush1.msra.mxu0 0.0
    %585 = vmatprep.subr.mxu0 0.0
    %586 = vmatpush1.msra.mxu0 0.0
    %587 = vmatprep.subr.mxu0 0.0
    %588 = vmatpush1.msra.mxu0 0.0
    %589 = vmatprep.subr.mxu0 0.0
    %590 = vmatpush1.msra.mxu0 0.0
    %591 = vmatprep.subr.mxu0 0.0
    %592 = vmatpush1.msra.mxu0 0.0
    %593 = vmatprep.subr.mxu0 0.0
    %594 = vmatpush1.msra.mxu0 0.0
    %595 = vmatprep.subr.mxu0 0.0
    %596 = vmatpush1.msra.mxu0 0.0
    %597 = vmatprep.subr.mxu0 0.0
    %598 = vmatpush1.msra.mxu0 0.0
    %599 = vmatprep.subr.mxu0 0.0
    %600 = vmatpush1.msra.mxu0 0.0
    %601 = vmatprep.subr.mxu0 0.0
    %602 = vmatpush1.msra.mxu0 0.0
    %603 = vmatprep.subr.mxu0 0.0
    %604 = vmatpush1.msra.mxu0 0.0
    %605 = vmatprep.subr.mxu0 0.0
    %606 = vmatpush1.msra.mxu0 0.0
    %607 = vmatprep.subr.mxu0 0.0
    %608 = vmatpush1.msra.mxu0 0.0
    %609 = vmatprep.subr.mxu0 0.0
    %610 = vmatpush1.msra.mxu0 0.0
    %611 = vmatprep.subr.mxu0 0.0
    %612 = vmatpush1.msra.mxu0 0.0
    %613 = vmatprep.subr.mxu0 0.0
    %614 = vmatpush1.msra.mxu0 0.0
    %615 = vmatprep.subr.mxu0 0.0
    %616 = vmatpush1.msra.mxu0 0.0
    %617 = vmatprep.subr.mxu0 0.0
    %618 = vmatpush1.msra.mxu0 0.0
    %619 = vmatprep.subr.mxu0 0.0
    %620 = vmatpush1.msra.mxu0 0.0
    %621 = vmatprep.subr.mxu0 0.0
    %622 = vmatpush1.msra.mxu0 0.0
    %623 = vmatprep.subr.mxu0 0.0
    %624 = vmatpush1.msra.mxu0 0.0
    %625 = vmatprep.subr.mxu0 0.0
    %626 = vmatpush1.msra.mxu0 0.0
    %627 = vmatprep.subr.mxu0 0.0
    %628 = vmatpush1.msra.mxu0 0.0
    %629 = vmatprep.mubr.f32.mxu0 0.0
    %630 = vmatmul.mubr.f32.gmra.mrb[0].mxu0 %v560
    %v631 = vpop.f32.mrb[0].mxu0
    %v632 = vadd.f32 0.0, %v631
    %v633 = vpop.f32.mrb[0].mxu0
    %634 = vdwg.mxu0
    %v635 = vlaneseq
    %v636 = vshrl.u32 %v635, 7
    %v637 = vsub.s32 0, %v636
    %v638 = vrot.slane %v67, %v637
    %v640 = vcombine.high %v638, %v638
    %v642 = vunpack.c.l.s4 1983009808
    %v643 = vunpack.c.0.s8 %v642
    %v644 = vlaneseq
    %v645 = vshrl.u32 %v644, 7
    %v646 = vsub.s32 %v643, %v645
    %v647 = vrot.slane %v638, %v646
    %v649 = vunpack.c.l.s4 1983009808
    %v650 = vunpack.c.0.s8 %v649
    %v651 = vlaneseq
    %v652 = vshrl.u32 %v651, 7
    %v653 = vsub.s32 %v650, %v652
    %v654 = vrot.slane %v640, %v653
    %v655 = vcombine.high %v647, %v647
    %v659 = vmul.f32 %v243, %v647
    %v660 = vmul.f32 %v251, %v655
    %v661 = vmul.f32 %v250, %v654
    %v662 = vmul.f32 %v252, %v647
    %v663 = vmul.f32 %v259, %v655
    %v664 = vmul.f32 %v260, %v654
    %v671 = vcombine.low %v659, %v660
    %v673 = vunpack.c.l.s4 1983009808
    %v674 = vunpack.c.0.s8 %v673
    %v675 = vlaneseq
    %v676 = vshrl.u32 %v675, 7
    %v677 = vsub.s32 %v674, %v676
    %v678 = vrot.slane %v671, %v677
    %v680 = vunpack.c.l.s4 1983009808
    %v681 = vunpack.c.0.s8 %v680
    %v682 = vlaneseq
    %v683 = vshrl.u32 %v682, 7
    %v684 = vsub.s32 %v681, %v683
    %v685 = vrot.slane %v661, %v684
    %v686 = vcombine.low %v678, %v685
    %v687 = vcombine.low %v662, %v663
    %v689 = vunpack.c.l.s4 1983009808
    %v690 = vunpack.c.0.s8 %v689
    %v691 = vlaneseq
    %v692 = vshrl.u32 %v691, 7
    %v693 = vsub.s32 %v690, %v692
    %v694 = vrot.slane %v687, %v693
    %v696 = vunpack.c.l.s4 1983009808
    %v697 = vunpack.c.0.s8 %v696
    %v698 = vlaneseq
    %v699 = vshrl.u32 %v698, 7
    %v700 = vsub.s32 %v697, %v699
    %v701 = vrot.slane %v664, %v700
    %v702 = vcombine.low %v694, %v701
    %vm705 = vcmask 521216
    %v706 = vsel %vm705, %v686, 0.0
    %707 = vadd.xlane.f32.xlu0 %v706
    %v708 = vpop.xlane.xlu0 %707
    %v709 = vsel %vm705, %v702, 0.0
    %710 = vadd.xlane.f32.xlu0 %v709
    %v711 = vpop.xlane.xlu0 %710
    %v714 = vlaneseq
    %v715 = vshrl.u32 %v714, 7
    %v716 = vsub.s32 0, %v715
    %v717 = vrot.slane %v708, %v716
    %v718 = vlaneseq
    %v719 = vshrl.u32 %v718, 7
    %v720 = vsub.s32 1, %v719
    %v721 = vrot.slane %v708, %v720
    %v722 = vlaneseq
    %v723 = vshrl.u32 %v722, 7
    %v724 = vsub.s32 2, %v723
    %v725 = vrot.slane %v708, %v724
    %v726 = vlaneseq
    %v727 = vshrl.u32 %v726, 7
    %v728 = vsub.s32 3, %v727
    %v729 = vrot.slane %v708, %v728
    %v730 = vlaneseq
    %v731 = vshrl.u32 %v730, 7
    %v732 = vsub.s32 4, %v731
    %v733 = vrot.slane %v708, %v732
    %v734 = vlaneseq
    %v735 = vshrl.u32 %v734, 7
    %v736 = vsub.s32 5, %v735
    %v737 = vrot.slane %v708, %v736
    %v738 = vlaneseq
    %v739 = vshrl.u32 %v738, 7
    %v740 = vsub.s32 0, %v739
    %v741 = vrot.slane %v711, %v740
    %v742 = vlaneseq
    %v743 = vshrl.u32 %v742, 7
    %v744 = vsub.s32 1, %v743
    %v745 = vrot.slane %v711, %v744
    %v746 = vlaneseq
    %v747 = vshrl.u32 %v746, 7
    %v748 = vsub.s32 2, %v747
    %v749 = vrot.slane %v711, %v748
    %v750 = vlaneseq
    %v751 = vshrl.u32 %v750, 7
    %v752 = vsub.s32 3, %v751
    %v753 = vrot.slane %v711, %v752
    %v754 = vlaneseq
    %v755 = vshrl.u32 %v754, 7
    %v756 = vsub.s32 4, %v755
    %v757 = vrot.slane %v711, %v756
    %v758 = vlaneseq
    %v759 = vshrl.u32 %v758, 7
    %v760 = vsub.s32 5, %v759
    %v761 = vrot.slane %v711, %v760
    %v762 = vcombine.low %v717, %v721
    %v763 = vcombine.low %v725, %v729
    %v764 = vcombine.low %v733, %v737
    %v766 = vunpack.c.l.s4 1966171168
    %v767 = vunpack.c.0.s8 %v766
    %v768 = vlaneseq
    %v769 = vshrl.u32 %v768, 7
    %v770 = vsub.s32 %v767, %v769
    %v771 = vrot.slane %v762, %v770
    %v773 = vunpack.c.l.s4 1966171168
    %v774 = vunpack.c.0.s8 %v773
    %v775 = vlaneseq
    %v776 = vshrl.u32 %v775, 7
    %v777 = vsub.s32 %v774, %v776
    %v778 = vrot.slane %v763, %v777
    %v780 = vunpack.c.l.s4 1966171168
    %v781 = vunpack.c.0.s8 %v780
    %v782 = vlaneseq
    %v783 = vshrl.u32 %v782, 7
    %v784 = vsub.s32 %v781, %v783
    %v785 = vrot.slane %v764, %v784
    %v786 = vcombine.low %v771, %v778
    %v788 = vunpack.c.l.s4 1966171168
    %v789 = vunpack.c.0.s8 %v788
    %v790 = vlaneseq
    %v791 = vshrl.u32 %v790, 7
    %v792 = vsub.s32 %v789, %v791
    %v793 = vrot.slane %v786, %v792
    %v795 = vunpack.c.l.s4 1966171168
    %v796 = vunpack.c.0.s8 %v795
    %v797 = vlaneseq
    %v798 = vshrl.u32 %v797, 7
    %v799 = vsub.s32 %v796, %v798
    %v800 = vrot.slane %v785, %v799
    %v801 = vcombine.low %v793, %v800
    %v802 = vcombine.low %v741, %v745
    %v803 = vcombine.low %v749, %v753
    %v804 = vcombine.low %v757, %v761
    %v806 = vunpack.c.l.s4 1966171168
    %v807 = vunpack.c.0.s8 %v806
    %v808 = vlaneseq
    %v809 = vshrl.u32 %v808, 7
    %v810 = vsub.s32 %v807, %v809
    %v811 = vrot.slane %v802, %v810
    %v813 = vunpack.c.l.s4 1966171168
    %v814 = vunpack.c.0.s8 %v813
    %v815 = vlaneseq
    %v816 = vshrl.u32 %v815, 7
    %v817 = vsub.s32 %v814, %v816
    %v818 = vrot.slane %v803, %v817
    %v820 = vunpack.c.l.s4 1966171168
    %v821 = vunpack.c.0.s8 %v820
    %v822 = vlaneseq
    %v823 = vshrl.u32 %v822, 7
    %v824 = vsub.s32 %v821, %v823
    %v825 = vrot.slane %v804, %v824
    %v826 = vcombine.low %v811, %v818
    %v828 = vunpack.c.l.s4 1966171168
    %v829 = vunpack.c.0.s8 %v828
    %v830 = vlaneseq
    %v831 = vshrl.u32 %v830, 7
    %v832 = vsub.s32 %v829, %v831
    %v833 = vrot.slane %v826, %v832
    %v835 = vunpack.c.l.s4 1966171168
    %v836 = vunpack.c.0.s8 %v835
    %v837 = vlaneseq
    %v838 = vshrl.u32 %v837, 7
    %v839 = vsub.s32 %v836, %v838
    %v840 = vrot.slane %v825, %v839
    %v841 = vcombine.low %v833, %v840
    %842 = vset.pattern.permute.xlu0 0
    %843 = vperm.xlu0 %842, %v801
    %v844 = vpop.permute.xlu0 %843
    %845 = vset.pattern.permute.xlu0 0
    %846 = vperm.xlu0 %845, %v841
    %v847 = vpop.permute.xlu0 %846
    %v848 = vlaneseq
    %v849 = vshrl.u32 %v848, 7
    %v850 = vsub.s32 %v417, %v849
    %v851 = vrot.slane %v844, %v850
    %v852 = vlaneseq
    %v853 = vshrl.u32 %v852, 7
    %v854 = vsub.s32 %v417, %v853
    %v855 = vrot.slane %v847, %v854
    %v857 = vunpack.c.l.s4 1966171168
    %v858 = vunpack.c.0.s8 %v857
    %v859 = vlaneseq
    %v860 = vshrl.u32 %v859, 7
    %v861 = vsub.s32 %v858, %v860
    %v862 = vrot.slane %v851, %v861
    %v864 = vunpack.c.l.s4 1966171168
    %v865 = vunpack.c.0.s8 %v864
    %v866 = vlaneseq
    %v867 = vshrl.u32 %v866, 7
    %v868 = vsub.s32 %v865, %v867
    %v869 = vrot.slane %v862, %v868
    %v871 = vunpack.c.l.s4 1966171168
    %v872 = vunpack.c.0.s8 %v871
    %v873 = vlaneseq
    %v874 = vshrl.u32 %v873, 7
    %v875 = vsub.s32 %v872, %v874
    %v876 = vrot.slane %v855, %v875
    %v878 = vunpack.c.l.s4 1966171168
    %v879 = vunpack.c.0.s8 %v878
    %v880 = vlaneseq
    %v881 = vshrl.u32 %v880, 7
    %v882 = vsub.s32 %v879, %v881
    %v883 = vrot.slane %v876, %v882
    %v886 = vsel %vm62, %v869, 1e-30
    %v887 = vsel %vm63, %v883, 1e-30
    %v888 = vsel %vm458, %v886, -inf
    %889 = vmax.xlane.f32.xlu0 %v888
    %v890 = vpop.xlane.xlu0 %889
    %v891 = vsel %vm458, %v887, -inf
    %892 = vmax.xlane.f32.xlu0 %v891
    %v893 = vpop.xlane.xlu0 %892
    %v894 = vsub.f32 %v886, %v890
    %v895 = vsub.f32 %v887, %v893
    %v896 = vmul.f32 %v894, 1.442695
    %v897 = vpow.pop %v896
    %v898 = vmul.f32 %v895, 1.442695
    %v899 = vpow.pop %v898
    %v900 = vsel %vm458, %v897, 0.0
    %901 = vadd.xlane.f32.xlu0 %v900
    %v902 = vpop.xlane.xlu0 %901
    %v903 = vsel %vm458, %v899, 0.0
    %904 = vadd.xlane.f32.xlu0 %v903
    %v905 = vpop.xlane.xlu0 %904
    %v906 = vrcp.pop %v902
    %v907 = vmul.f32 %v897, %v906
    %v908 = vrcp.pop %v905
    %v909 = vmul.f32 %v899, %v908
    %v910 = vcombine.low %v243, %v251
    %v912 = vunpack.c.l.s4 1983009808
    %v913 = vunpack.c.0.s8 %v912
    %v914 = vlaneseq
    %v915 = vshrl.u32 %v914, 7
    %v916 = vsub.s32 %v913, %v915
    %v917 = vrot.slane %v910, %v916
    %v919 = vunpack.c.l.s4 1983009808
    %v920 = vunpack.c.0.s8 %v919
    %v921 = vlaneseq
    %v922 = vshrl.u32 %v921, 7
    %v923 = vsub.s32 %v920, %v922
    %v924 = vrot.slane %v250, %v923
    %v925 = vcombine.low %v917, %v924
    %v927 = vsel %vm481, %v907, 0
    %v929 = vsel %vm485, %v925, 0
    %931 = vmatprep.subr.mxu0 0.0
    %932 = vmatpush1.msra.mxu0 %v929
    %933 = vmatprep.subr.mxu0 0.0
    %934 = vmatpush1.msra.mxu0 0.0
    %935 = vmatprep.subr.mxu0 0.0
    %936 = vmatpush1.msra.mxu0 0.0
    %937 = vmatprep.subr.mxu0 0.0
    %938 = vmatpush1.msra.mxu0 0.0
    %939 = vmatprep.subr.mxu0 0.0
    %940 = vmatpush1.msra.mxu0 0.0
    %941 = vmatprep.subr.mxu0 0.0
    %942 = vmatpush1.msra.mxu0 0.0
    %943 = vmatprep.subr.mxu0 0.0
    %944 = vmatpush1.msra.mxu0 0.0
    %945 = vmatprep.subr.mxu0 0.0
    %946 = vmatpush1.msra.mxu0 0.0
    %947 = vmatprep.subr.mxu0 0.0
    %948 = vmatpush1.msra.mxu0 0.0
    %949 = vmatprep.subr.mxu0 0.0
    %950 = vmatpush1.msra.mxu0 0.0
    %951 = vmatprep.subr.mxu0 0.0
    %952 = vmatpush1.msra.mxu0 0.0
    %953 = vmatprep.subr.mxu0 0.0
    %954 = vmatpush1.msra.mxu0 0.0
    %955 = vmatprep.subr.mxu0 0.0
    %956 = vmatpush1.msra.mxu0 0.0
    %957 = vmatprep.subr.mxu0 0.0
    %958 = vmatpush1.msra.mxu0 0.0
    %959 = vmatprep.subr.mxu0 0.0
    %960 = vmatpush1.msra.mxu0 0.0
    %961 = vmatprep.subr.mxu0 0.0
    %962 = vmatpush1.msra.mxu0 0.0
    %963 = vmatprep.subr.mxu0 0.0
    %964 = vmatpush1.msra.mxu0 0.0
    %965 = vmatprep.subr.mxu0 0.0
    %966 = vmatpush1.msra.mxu0 0.0
    %967 = vmatprep.subr.mxu0 0.0
    %968 = vmatpush1.msra.mxu0 0.0
    %969 = vmatprep.subr.mxu0 0.0
    %970 = vmatpush1.msra.mxu0 0.0
    %971 = vmatprep.subr.mxu0 0.0
    %972 = vmatpush1.msra.mxu0 0.0
    %973 = vmatprep.subr.mxu0 0.0
    %974 = vmatpush1.msra.mxu0 0.0
    %975 = vmatprep.subr.mxu0 0.0
    %976 = vmatpush1.msra.mxu0 0.0
    %977 = vmatprep.subr.mxu0 0.0
    %978 = vmatpush1.msra.mxu0 0.0
    %979 = vmatprep.subr.mxu0 0.0
    %980 = vmatpush1.msra.mxu0 0.0
    %981 = vmatprep.subr.mxu0 0.0
    %982 = vmatpush1.msra.mxu0 0.0
    %983 = vmatprep.subr.mxu0 0.0
    %984 = vmatpush1.msra.mxu0 0.0
    %985 = vmatprep.subr.mxu0 0.0
    %986 = vmatpush1.msra.mxu0 0.0
    %987 = vmatprep.subr.mxu0 0.0
    %988 = vmatpush1.msra.mxu0 0.0
    %989 = vmatprep.subr.mxu0 0.0
    %990 = vmatpush1.msra.mxu0 0.0
    %991 = vmatprep.subr.mxu0 0.0
    %992 = vmatpush1.msra.mxu0 0.0
    %993 = vmatprep.subr.mxu0 0.0
    %994 = vmatpush1.msra.mxu0 0.0
    %995 = vmatprep.mubr.f32.mxu0 0.0
    %996 = vmatmul.mubr.f32.gmra.mrb[0].mxu0 %v927
    %v997 = vpop.f32.mrb[0].mxu0
    %v998 = vadd.f32 0.0, %v997
    %v999 = vpop.f32.mrb[0].mxu0
    %1000 = vdwg.mxu0
    %v1001 = vcombine.low %v252, %v259
    %v1003 = vunpack.c.l.s4 1983009808
    %v1004 = vunpack.c.0.s8 %v1003
    %v1005 = vlaneseq
    %v1006 = vshrl.u32 %v1005, 7
    %v1007 = vsub.s32 %v1004, %v1006
    %v1008 = vrot.slane %v1001, %v1007
    %v1010 = vunpack.c.l.s4 1983009808
    %v1011 = vunpack.c.0.s8 %v1010
    %v1012 = vlaneseq
    %v1013 = vshrl.u32 %v1012, 7
    %v1014 = vsub.s32 %v1011, %v1013
    %v1015 = vrot.slane %v260, %v1014
    %v1016 = vcombine.low %v1008, %v1015
    %v1018 = vsel %vm481, %v909, 0
    %v1020 = vsel %vm485, %v1016, 0
    %1022 = vmatprep.subr.mxu0 0.0
    %1023 = vmatpush1.msra.mxu0 %v1020
    %1024 = vmatprep.subr.mxu0 0.0
    %1025 = vmatpush1.msra.mxu0 0.0
    %1026 = vmatprep.subr.mxu0 0.0
    %1027 = vmatpush1.msra.mxu0 0.0
    %1028 = vmatprep.subr.mxu0 0.0
    %1029 = vmatpush1.msra.mxu0 0.0
    %1030 = vmatprep.subr.mxu0 0.0
    %1031 = vmatpush1.msra.mxu0 0.0
    %1032 = vmatprep.subr.mxu0 0.0
    %1033 = vmatpush1.msra.mxu0 0.0
    %1034 = vmatprep.subr.mxu0 0.0
    %1035 = vmatpush1.msra.mxu0 0.0
    %1036 = vmatprep.subr.mxu0 0.0
    %1037 = vmatpush1.msra.mxu0 0.0
    %1038 = vmatprep.subr.mxu0 0.0
    %1039 = vmatpush1.msra.mxu0 0.0
    %1040 = vmatprep.subr.mxu0 0.0
    %1041 = vmatpush1.msra.mxu0 0.0
    %1042 = vmatprep.subr.mxu0 0.0
    %1043 = vmatpush1.msra.mxu0 0.0
    %1044 = vmatprep.subr.mxu0 0.0
    %1045 = vmatpush1.msra.mxu0 0.0
    %1046 = vmatprep.subr.mxu0 0.0
    %1047 = vmatpush1.msra.mxu0 0.0
    %1048 = vmatprep.subr.mxu0 0.0
    %1049 = vmatpush1.msra.mxu0 0.0
    %1050 = vmatprep.subr.mxu0 0.0
    %1051 = vmatpush1.msra.mxu0 0.0
    %1052 = vmatprep.subr.mxu0 0.0
    %1053 = vmatpush1.msra.mxu0 0.0
    %1054 = vmatprep.subr.mxu0 0.0
    %1055 = vmatpush1.msra.mxu0 0.0
    %1056 = vmatprep.subr.mxu0 0.0
    %1057 = vmatpush1.msra.mxu0 0.0
    %1058 = vmatprep.subr.mxu0 0.0
    %1059 = vmatpush1.msra.mxu0 0.0
    %1060 = vmatprep.subr.mxu0 0.0
    %1061 = vmatpush1.msra.mxu0 0.0
    %1062 = vmatprep.subr.mxu0 0.0
    %1063 = vmatpush1.msra.mxu0 0.0
    %1064 = vmatprep.subr.mxu0 0.0
    %1065 = vmatpush1.msra.mxu0 0.0
    %1066 = vmatprep.subr.mxu0 0.0
    %1067 = vmatpush1.msra.mxu0 0.0
    %1068 = vmatprep.subr.mxu0 0.0
    %1069 = vmatpush1.msra.mxu0 0.0
    %1070 = vmatprep.subr.mxu0 0.0
    %1071 = vmatpush1.msra.mxu0 0.0
    %1072 = vmatprep.subr.mxu0 0.0
    %1073 = vmatpush1.msra.mxu0 0.0
    %1074 = vmatprep.subr.mxu0 0.0
    %1075 = vmatpush1.msra.mxu0 0.0
    %1076 = vmatprep.subr.mxu0 0.0
    %1077 = vmatpush1.msra.mxu0 0.0
    %1078 = vmatprep.subr.mxu0 0.0
    %1079 = vmatpush1.msra.mxu0 0.0
    %1080 = vmatprep.subr.mxu0 0.0
    %1081 = vmatpush1.msra.mxu0 0.0
    %1082 = vmatprep.subr.mxu0 0.0
    %1083 = vmatpush1.msra.mxu0 0.0
    %1084 = vmatprep.subr.mxu0 0.0
    %1085 = vmatpush1.msra.mxu0 0.0
    %1086 = vmatprep.mubr.f32.mxu0 0.0
    %1087 = vmatmul.mubr.f32.gmra.mrb[0].mxu0 %v1018
    %v1088 = vpop.f32.mrb[0].mxu0
    %v1089 = vadd.f32 0.0, %v1088
    %v1090 = vpop.f32.mrb[0].mxu0
    %1091 = vdwg.mxu0
    %v1092 = vld [vmem:[%s5] sm:$0xf]
    %v1093 = vld [vmem:[%s5 + $0x4] sm:$0xf]
    %v1094 = vmul.f32 %v1092, %v33
    %v1095 = vmul.f32 %v1093, %v34
    %v1096 = vld [vmem:[%s6] sm:$0xf]
    %v1097 = vld [vmem:[%s6 + $0x4] sm:$0xf]
    %v1098 = vmul.f32 %v1096, %v145
    %v1099 = vmul.f32 %v1097, %v149
    %vm1100 = vcmask 523264
    %v1102 = vsel %vm1100, %v998, 0
    %v1105 = vsel %vm1100, %v1098, 0
    %1107 = vmatprep.subr.mxu0 0.0
    %1108 = vmatpush1.xpose.msra.mxu0 %v1105
    %1109 = vmatprep.subr.mxu0 0.0
    %1110 = vmatpush1.xpose.msra.mxu0 0.0
    %1111 = vmatprep.subr.mxu0 0.0
    %1112 = vmatpush1.xpose.msra.mxu0 0.0
    %1113 = vmatprep.subr.mxu0 0.0
    %1114 = vmatpush1.xpose.msra.mxu0 0.0
    %1115 = vmatprep.subr.mxu0 0.0
    %1116 = vmatpush1.xpose.msra.mxu0 0.0
    %1117 = vmatprep.subr.mxu0 0.0
    %1118 = vmatpush1.xpose.msra.mxu0 0.0
    %1119 = vmatprep.subr.mxu0 0.0
    %1120 = vmatpush1.xpose.msra.mxu0 0.0
    %1121 = vmatprep.subr.mxu0 0.0
    %1122 = vmatpush1.xpose.msra.mxu0 0.0
    %1123 = vmatprep.subr.mxu0 0.0
    %1124 = vmatpush1.xpose.msra.mxu0 0.0
    %1125 = vmatprep.subr.mxu0 0.0
    %1126 = vmatpush1.xpose.msra.mxu0 0.0
    %1127 = vmatprep.subr.mxu0 0.0
    %1128 = vmatpush1.xpose.msra.mxu0 0.0
    %1129 = vmatprep.subr.mxu0 0.0
    %1130 = vmatpush1.xpose.msra.mxu0 0.0
    %1131 = vmatprep.subr.mxu0 0.0
    %1132 = vmatpush1.xpose.msra.mxu0 0.0
    %1133 = vmatprep.subr.mxu0 0.0
    %1134 = vmatpush1.xpose.msra.mxu0 0.0
    %1135 = vmatprep.subr.mxu0 0.0
    %1136 = vmatpush1.xpose.msra.mxu0 0.0
    %1137 = vmatprep.subr.mxu0 0.0
    %1138 = vmatpush1.xpose.msra.mxu0 0.0
    %1139 = vmatprep.subr.mxu0 0.0
    %1140 = vmatpush1.xpose.msra.mxu0 0.0
    %1141 = vmatprep.subr.mxu0 0.0
    %1142 = vmatpush1.xpose.msra.mxu0 0.0
    %1143 = vmatprep.subr.mxu0 0.0
    %1144 = vmatpush1.xpose.msra.mxu0 0.0
    %1145 = vmatprep.subr.mxu0 0.0
    %1146 = vmatpush1.xpose.msra.mxu0 0.0
    %1147 = vmatprep.subr.mxu0 0.0
    %1148 = vmatpush1.xpose.msra.mxu0 0.0
    %1149 = vmatprep.subr.mxu0 0.0
    %1150 = vmatpush1.xpose.msra.mxu0 0.0
    %1151 = vmatprep.subr.mxu0 0.0
    %1152 = vmatpush1.xpose.msra.mxu0 0.0
    %1153 = vmatprep.subr.mxu0 0.0
    %1154 = vmatpush1.xpose.msra.mxu0 0.0
    %1155 = vmatprep.subr.mxu0 0.0
    %1156 = vmatpush1.xpose.msra.mxu0 0.0
    %1157 = vmatprep.subr.mxu0 0.0
    %1158 = vmatpush1.xpose.msra.mxu0 0.0
    %1159 = vmatprep.subr.mxu0 0.0
    %1160 = vmatpush1.xpose.msra.mxu0 0.0
    %1161 = vmatprep.subr.mxu0 0.0
    %1162 = vmatpush1.xpose.msra.mxu0 0.0
    %1163 = vmatprep.subr.mxu0 0.0
    %1164 = vmatpush1.xpose.msra.mxu0 0.0
    %1165 = vmatprep.subr.mxu0 0.0
    %1166 = vmatpush1.xpose.msra.mxu0 0.0
    %1167 = vmatprep.subr.mxu0 0.0
    %1168 = vmatpush1.xpose.msra.mxu0 0.0
    %1169 = vmatprep.subr.mxu0 0.0
    %1170 = vmatpush1.xpose.msra.mxu0 0.0
    %1171 = vmatprep.mubr.f32.mxu0 0.0
    %1172 = vmatmul.mubr.f32.gmra.mrb[0].mxu0 %v1102
    %v1173 = vpop.f32.mrb[0].mxu0
    %v1174 = vadd.f32 0.0, %v1173
    %v1175 = vpop.f32.mrb[0].mxu0
    %1176 = vdwg.mxu0
    %v1178 = vsel %vm1100, %v1089, 0
    %v1181 = vsel %vm1100, %v1099, 0
    %1183 = vmatprep.subr.mxu0 0.0
    %1184 = vmatpush1.xpose.msra.mxu0 %v1181
    %1185 = vmatprep.subr.mxu0 0.0
    %1186 = vmatpush1.xpose.msra.mxu0 0.0
    %1187 = vmatprep.subr.mxu0 0.0
    %1188 = vmatpush1.xpose.msra.mxu0 0.0
    %1189 = vmatprep.subr.mxu0 0.0
    %1190 = vmatpush1.xpose.msra.mxu0 0.0
    %1191 = vmatprep.subr.mxu0 0.0
    %1192 = vmatpush1.xpose.msra.mxu0 0.0
    %1193 = vmatprep.subr.mxu0 0.0
    %1194 = vmatpush1.xpose.msra.mxu0 0.0
    %1195 = vmatprep.subr.mxu0 0.0
    %1196 = vmatpush1.xpose.msra.mxu0 0.0
    %1197 = vmatprep.subr.mxu0 0.0
    %1198 = vmatpush1.xpose.msra.mxu0 0.0
    %1199 = vmatprep.subr.mxu0 0.0
    %1200 = vmatpush1.xpose.msra.mxu0 0.0
    %1201 = vmatprep.subr.mxu0 0.0
    %1202 = vmatpush1.xpose.msra.mxu0 0.0
    %1203 = vmatprep.subr.mxu0 0.0
    %1204 = vmatpush1.xpose.msra.mxu0 0.0
    %1205 = vmatprep.subr.mxu0 0.0
    %1206 = vmatpush1.xpose.msra.mxu0 0.0
    %1207 = vmatprep.subr.mxu0 0.0
    %1208 = vmatpush1.xpose.msra.mxu0 0.0
    %1209 = vmatprep.subr.mxu0 0.0
    %1210 = vmatpush1.xpose.msra.mxu0 0.0
    %1211 = vmatprep.subr.mxu0 0.0
    %1212 = vmatpush1.xpose.msra.mxu0 0.0
    %1213 = vmatprep.subr.mxu0 0.0
    %1214 = vmatpush1.xpose.msra.mxu0 0.0
    %1215 = vmatprep.subr.mxu0 0.0
    %1216 = vmatpush1.xpose.msra.mxu0 0.0
    %1217 = vmatprep.subr.mxu0 0.0
    %1218 = vmatpush1.xpose.msra.mxu0 0.0
    %1219 = vmatprep.subr.mxu0 0.0
    %1220 = vmatpush1.xpose.msra.mxu0 0.0
    %1221 = vmatprep.subr.mxu0 0.0
    %1222 = vmatpush1.xpose.msra.mxu0 0.0
    %1223 = vmatprep.subr.mxu0 0.0
    %1224 = vmatpush1.xpose.msra.mxu0 0.0
    %1225 = vmatprep.subr.mxu0 0.0
    %1226 = vmatpush1.xpose.msra.mxu0 0.0
    %1227 = vmatprep.subr.mxu0 0.0
    %1228 = vmatpush1.xpose.msra.mxu0 0.0
    %1229 = vmatprep.subr.mxu0 0.0
    %1230 = vmatpush1.xpose.msra.mxu0 0.0
    %1231 = vmatprep.subr.mxu0 0.0
    %1232 = vmatpush1.xpose.msra.mxu0 0.0
    %1233 = vmatprep.subr.mxu0 0.0
    %1234 = vmatpush1.xpose.msra.mxu0 0.0
    %1235 = vmatprep.subr.mxu0 0.0
    %1236 = vmatpush1.xpose.msra.mxu0 0.0
    %1237 = vmatprep.subr.mxu0 0.0
    %1238 = vmatpush1.xpose.msra.mxu0 0.0
    %1239 = vmatprep.subr.mxu0 0.0
    %1240 = vmatpush1.xpose.msra.mxu0 0.0
    %1241 = vmatprep.subr.mxu0 0.0
    %1242 = vmatpush1.xpose.msra.mxu0 0.0
    %1243 = vmatprep.subr.mxu0 0.0
    %1244 = vmatpush1.xpose.msra.mxu0 0.0
    %1245 = vmatprep.subr.mxu0 0.0
    %1246 = vmatpush1.xpose.msra.mxu0 0.0
    %1247 = vmatprep.mubr.f32.mxu0 0.0
    %1248 = vmatmul.mubr.f32.gmra.mrb[0].mxu0 %v1178
    %v1249 = vpop.f32.mrb[0].mxu0
    %v1250 = vadd.f32 0.0, %v1249
    %v1251 = vpop.f32.mrb[0].mxu0
    %1252 = vdwg.mxu0
    %vm1253 = vcmask 261120
    %v1255 = vsel %vm1253, %v556, 0
    %v1258 = vsel %vm1253, %v1094, 0
    %1260 = vmatprep.subr.mxu0 0.0
    %1261 = vmatpush1.xpose.msra.mxu0 %v1258
    %1262 = vmatprep.subr.mxu0 0.0
    %1263 = vmatpush1.xpose.msra.mxu0 0.0
    %1264 = vmatprep.subr.mxu0 0.0
    %1265 = vmatpush1.xpose.msra.mxu0 0.0
    %1266 = vmatprep.subr.mxu0 0.0
    %1267 = vmatpush1.xpose.msra.mxu0 0.0
    %1268 = vmatprep.subr.mxu0 0.0
    %1269 = vmatpush1.xpose.msra.mxu0 0.0
    %1270 = vmatprep.subr.mxu0 0.0
    %1271 = vmatpush1.xpose.msra.mxu0 0.0
    %1272 = vmatprep.subr.mxu0 0.0
    %1273 = vmatpush1.xpose.msra.mxu0 0.0
    %1274 = vmatprep.subr.mxu0 0.0
    %1275 = vmatpush1.xpose.msra.mxu0 0.0
    %1276 = vmatprep.subr.mxu0 0.0
    %1277 = vmatpush1.xpose.msra.mxu0 0.0
    %1278 = vmatprep.subr.mxu0 0.0
    %1279 = vmatpush1.xpose.msra.mxu0 0.0
    %1280 = vmatprep.subr.mxu0 0.0
    %1281 = vmatpush1.xpose.msra.mxu0 0.0
    %1282 = vmatprep.subr.mxu0 0.0
    %1283 = vmatpush1.xpose.msra.mxu0 0.0
    %1284 = vmatprep.subr.mxu0 0.0
    %1285 = vmatpush1.xpose.msra.mxu0 0.0
    %1286 = vmatprep.subr.mxu0 0.0
    %1287 = vmatpush1.xpose.msra.mxu0 0.0
    %1288 = vmatprep.subr.mxu0 0.0
    %1289 = vmatpush1.xpose.msra.mxu0 0.0
    %1290 = vmatprep.subr.mxu0 0.0
    %1291 = vmatpush1.xpose.msra.mxu0 0.0
    %1292 = vmatprep.subr.mxu0 0.0
    %1293 = vmatpush1.xpose.msra.mxu0 0.0
    %1294 = vmatprep.subr.mxu0 0.0
    %1295 = vmatpush1.xpose.msra.mxu0 0.0
    %1296 = vmatprep.subr.mxu0 0.0
    %1297 = vmatpush1.xpose.msra.mxu0 0.0
    %1298 = vmatprep.subr.mxu0 0.0
    %1299 = vmatpush1.xpose.msra.mxu0 0.0
    %1300 = vmatprep.subr.mxu0 0.0
    %1301 = vmatpush1.xpose.msra.mxu0 0.0
    %1302 = vmatprep.subr.mxu0 0.0
    %1303 = vmatpush1.xpose.msra.mxu0 0.0
    %1304 = vmatprep.subr.mxu0 0.0
    %1305 = vmatpush1.xpose.msra.mxu0 0.0
    %1306 = vmatprep.subr.mxu0 0.0
    %1307 = vmatpush1.xpose.msra.mxu0 0.0
    %1308 = vmatprep.subr.mxu0 0.0
    %1309 = vmatpush1.xpose.msra.mxu0 0.0
    %1310 = vmatprep.subr.mxu0 0.0
    %1311 = vmatpush1.xpose.msra.mxu0 0.0
    %1312 = vmatprep.subr.mxu0 0.0
    %1313 = vmatpush1.xpose.msra.mxu0 0.0
    %1314 = vmatprep.subr.mxu0 0.0
    %1315 = vmatpush1.xpose.msra.mxu0 0.0
    %1316 = vmatprep.subr.mxu0 0.0
    %1317 = vmatpush1.xpose.msra.mxu0 0.0
    %1318 = vmatprep.subr.mxu0 0.0
    %1319 = vmatpush1.xpose.msra.mxu0 0.0
    %1320 = vmatprep.subr.mxu0 0.0
    %1321 = vmatpush1.xpose.msra.mxu0 0.0
    %1322 = vmatprep.subr.mxu0 0.0
    %1323 = vmatpush1.xpose.msra.mxu0 0.0
    %1324 = vmatprep.mubr.f32.mxu0 0.0
    %1325 = vmatmul.mubr.f32.gmra.mrb[0].mxu0 %v1255
    %v1326 = vpop.f32.mrb[0].mxu0
    %v1327 = vadd.f32 %v1174, %v1326
    %v1328 = vpop.f32.mrb[0].mxu0
    %1329 = vdwg.mxu0
    %v1331 = vsel %vm1253, %v632, 0
    %v1334 = vsel %vm1253, %v1095, 0
    %1336 = vmatprep.subr.mxu0 0.0
    %1337 = vmatpush1.xpose.msra.mxu0 %v1334
    %1338 = vmatprep.subr.mxu0 0.0
    %1339 = vmatpush1.xpose.msra.mxu0 0.0
    %1340 = vmatprep.subr.mxu0 0.0
    %1341 = vmatpush1.xpose.msra.mxu0 0.0
    %1342 = vmatprep.subr.mxu0 0.0
    %1343 = vmatpush1.xpose.msra.mxu0 0.0
    %1344 = vmatprep.subr.mxu0 0.0
    %1345 = vmatpush1.xpose.msra.mxu0 0.0
    %1346 = vmatprep.subr.mxu0 0.0
    %1347 = vmatpush1.xpose.msra.mxu0 0.0
    %1348 = vmatprep.subr.mxu0 0.0
    %1349 = vmatpush1.xpose.msra.mxu0 0.0
    %1350 = vmatprep.subr.mxu0 0.0
    %1351 = vmatpush1.xpose.msra.mxu0 0.0
    %1352 = vmatprep.subr.mxu0 0.0
    %1353 = vmatpush1.xpose.msra.mxu0 0.0
    %1354 = vmatprep.subr.mxu0 0.0
    %1355 = vmatpush1.xpose.msra.mxu0 0.0
    %1356 = vmatprep.subr.mxu0 0.0
    %1357 = vmatpush1.xpose.msra.mxu0 0.0
    %1358 = vmatprep.subr.mxu0 0.0
    %1359 = vmatpush1.xpose.msra.mxu0 0.0
    %1360 = vmatprep.subr.mxu0 0.0
    %1361 = vmatpush1.xpose.msra.mxu0 0.0
    %1362 = vmatprep.subr.mxu0 0.0
    %1363 = vmatpush1.xpose.msra.mxu0 0.0
    %1364 = vmatprep.subr.mxu0 0.0
    %1365 = vmatpush1.xpose.msra.mxu0 0.0
    %1366 = vmatprep.subr.mxu0 0.0
    %1367 = vmatpush1.xpose.msra.mxu0 0.0
    %1368 = vmatprep.subr.mxu0 0.0
    %1369 = vmatpush1.xpose.msra.mxu0 0.0
    %1370 = vmatprep.subr.mxu0 0.0
    %1371 = vmatpush1.xpose.msra.mxu0 0.0
    %1372 = vmatprep.subr.mxu0 0.0
    %1373 = vmatpush1.xpose.msra.mxu0 0.0
    %1374 = vmatprep.subr.mxu0 0.0
    %1375 = vmatpush1.xpose.msra.mxu0 0.0
    %1376 = vmatprep.subr.mxu0 0.0
    %1377 = vmatpush1.xpose.msra.mxu0 0.0
    %1378 = vmatprep.subr.mxu0 0.0
    %1379 = vmatpush1.xpose.msra.mxu0 0.0
    %1380 = vmatprep.subr.mxu0 0.0
    %1381 = vmatpush1.xpose.msra.mxu0 0.0
    %1382 = vmatprep.subr.mxu0 0.0
    %1383 = vmatpush1.xpose.msra.mxu0 0.0
    %1384 = vmatprep.subr.mxu0 0.0
    %1385 = vmatpush1.xpose.msra.mxu0 0.0
    %1386 = vmatprep.subr.mxu0 0.0
    %1387 = vmatpush1.xpose.msra.mxu0 0.0
    %1388 = vmatprep.subr.mxu0 0.0
    %1389 = vmatpush1.xpose.msra.mxu0 0.0
    %1390 = vmatprep.subr.mxu0 0.0
    %1391 = vmatpush1.xpose.msra.mxu0 0.0
    %1392 = vmatprep.subr.mxu0 0.0
    %1393 = vmatpush1.xpose.msra.mxu0 0.0
    %1394 = vmatprep.subr.mxu0 0.0
    %1395 = vmatpush1.xpose.msra.mxu0 0.0
    %1396 = vmatprep.subr.mxu0 0.0
    %1397 = vmatpush1.xpose.msra.mxu0 0.0
    %1398 = vmatprep.subr.mxu0 0.0
    %1399 = vmatpush1.xpose.msra.mxu0 0.0
    %1400 = vmatprep.mubr.f32.mxu0 0.0
    %1401 = vmatmul.mubr.f32.gmra.mrb[0].mxu0 %v1331
    %v1402 = vpop.f32.mrb[0].mxu0
    %v1403 = vadd.f32 %v1250, %v1402
    %v1404 = vpop.f32.mrb[0].mxu0
    %1405 = vdwg.mxu0
    %vm1406 = vcmask 24576
    %1407 = vst.msk [vmem:[#allocation2] sm:$0x1] %vm1406, %v1327
    %1408 = vst.msk [vmem:[#allocation2 + $0x1] sm:$0x1] %vm1406, %v1403
    %v1410 = vunpack.c.l.s4 1966171168
    %v1411 = vunpack.c.0.s8 %v1410
    %v1412 = vlaneseq
    %v1413 = vshrl.u32 %v1412, 7
    %v1414 = vsub.s32 %v1411, %v1413
    %v1415 = vrot.slane %v1094, %v1414
    %v1416 = vcombine.high %v1415, %v1415
    %v1418 = vunpack.c.l.s4 1966171168
    %v1419 = vunpack.c.0.s8 %v1418
    %v1420 = vlaneseq
    %v1421 = vshrl.u32 %v1420, 7
    %v1422 = vsub.s32 %v1419, %v1421
    %v1423 = vrot.slane %v1415, %v1422
    %v1425 = vunpack.c.l.s4 1966171168
    %v1426 = vunpack.c.0.s8 %v1425
    %v1427 = vlaneseq
    %v1428 = vshrl.u32 %v1427, 7
    %v1429 = vsub.s32 %v1426, %v1428
    %v1430 = vrot.slane %v1416, %v1429
    %v1431 = vcombine.high %v1423, %v1423
    %v1432 = vcombine.high %v1430, %v1430
    %v1434 = vunpack.c.l.s4 1966171168
    %v1435 = vunpack.c.0.s8 %v1434
    %v1436 = vlaneseq
    %v1437 = vshrl.u32 %v1436, 7
    %v1438 = vsub.s32 %v1435, %v1437
    %v1439 = vrot.slane %v1095, %v1438
    %v1440 = vcombine.high %v1439, %v1439
    %v1442 = vunpack.c.l.s4 1966171168
    %v1443 = vunpack.c.0.s8 %v1442
    %v1444 = vlaneseq
    %v1445 = vshrl.u32 %v1444, 7
    %v1446 = vsub.s32 %v1443, %v1445
    %v1447 = vrot.slane %v1439, %v1446
    %v1449 = vunpack.c.l.s4 1966171168
    %v1450 = vunpack.c.0.s8 %v1449
    %v1451 = vlaneseq
    %v1452 = vshrl.u32 %v1451, 7
    %v1453 = vsub.s32 %v1450, %v1452
    %v1454 = vrot.slane %v1440, %v1453
    %v1455 = vcombine.high %v1447, %v1447
    %v1456 = vcombine.high %v1454, %v1454
    %v1457 = vlaneseq
    %v1458 = vshrl.u32 %v1457, 7
    %v1459 = vsub.s32 0, %v1458
    %v1460 = vrot.slane %v1423, %v1459
    %v1461 = vlaneseq
    %v1462 = vshrl.u32 %v1461, 7
    %v1463 = vsub.s32 0, %v1462
    %v1464 = vrot.slane %v1430, %v1463
    %v1465 = vlaneseq
    %v1466 = vshrl.u32 %v1465, 7
    %v1467 = vsub.s32 0, %v1466
    %v1468 = vrot.slane %v1431, %v1467
    %v1469 = vlaneseq
    %v1470 = vshrl.u32 %v1469, 7
    %v1471 = vsub.s32 0, %v1470
    %v1472 = vrot.slane %v1432, %v1471
    %v1473 = vlaneseq
    %v1474 = vshrl.u32 %v1473, 7
    %v1475 = vsub.s32 0, %v1474
    %v1476 = vrot.slane %v1447, %v1475
    %v1477 = vlaneseq
    %v1478 = vshrl.u32 %v1477, 7
    %v1479 = vsub.s32 0, %v1478
    %v1480 = vrot.slane %v1454, %v1479
    %v1481 = vlaneseq
    %v1482 = vshrl.u32 %v1481, 7
    %v1483 = vsub.s32 0, %v1482
    %v1484 = vrot.slane %v1455, %v1483
    %v1485 = vlaneseq
    %v1486 = vshrl.u32 %v1485, 7
    %v1487 = vsub.s32 0, %v1486
    %v1488 = vrot.slane %v1456, %v1487
    %v1497 = vmul.f32 %v1460, %v1094
    %v1498 = vmul.f32 %v1464, %v1094
    %v1499 = vmul.f32 %v1468, %v1094
    %v1500 = vmul.f32 %v1472, %v1094
    %v1501 = vmul.f32 %v1476, %v1095
    %v1502 = vmul.f32 %v1480, %v1095
    %v1503 = vmul.f32 %v1484, %v1095
    %v1504 = vmul.f32 %v1488, %v1095
    %vm1505 = vcmask 257024
    %v1506 = vsel %vm1505, %v1497, 0.0
    %v1507 = vsel %vm1505, %v1501, 0.0
    %v1508 = vadd.f32 %v1506, %v1507
    %v1509 = vsel %vm1505, %v1498, 0.0
    %v1510 = vsel %vm1505, %v1502, 0.0
    %v1511 = vadd.f32 %v1509, %v1510
    %v1512 = vsel %vm1505, %v1499, 0.0
    %v1513 = vsel %vm1505, %v1503, 0.0
    %v1514 = vadd.f32 %v1512, %v1513
    %v1515 = vsel %vm1505, %v1500, 0.0
    %v1516 = vsel %vm1505, %v1504, 0.0
    %v1517 = vadd.f32 %v1515, %v1516
    %v1518 = vsel %vm1505, %v1094, 0.0
    %v1519 = vsel %vm1505, %v1095, 0.0
    %v1520 = vadd.f32 %v1518, %v1519
    %v1521 = vmul.f32 %v1094, %v1094
    %v1522 = vmul.f32 %v1095, %v1095
    %v1523 = vsel %vm1505, %v1521, 0.0
    %v1524 = vsel %vm1505, %v1522, 0.0
    %v1525 = vadd.f32 %v1523, %v1524
    %v1526 = vmul.f32 %v1520, 0.5
    %v1527 = vmul.f32 %v1508, 0.5
    %v1528 = vmul.f32 %v1511, 0.5
    %v1529 = vmul.f32 %v1514, 0.5
    %v1530 = vmul.f32 %v1517, 0.5
    %v1533 = vunpack.c.l.s4 1966171168
    %v1534 = vunpack.c.0.s8 %v1533
    %v1535 = vlaneseq
    %v1536 = vshrl.u32 %v1535, 7
    %v1537 = vsub.s32 %v1534, %v1536
    %v1538 = vrot.slane %v1526, %v1537
    %v1539 = vcombine.high %v1538, %v1538
    %v1541 = vunpack.c.l.s4 1966171168
    %v1542 = vunpack.c.0.s8 %v1541
    %v1543 = vlaneseq
    %v1544 = vshrl.u32 %v1543, 7
    %v1545 = vsub.s32 %v1542, %v1544
    %v1546 = vrot.slane %v1538, %v1545
    %v1548 = vunpack.c.l.s4 1966171168
    %v1549 = vunpack.c.0.s8 %v1548
    %v1550 = vlaneseq
    %v1551 = vshrl.u32 %v1550, 7
    %v1552 = vsub.s32 %v1549, %v1551
    %v1553 = vrot.slane %v1539, %v1552
    %v1554 = vcombine.high %v1546, %v1546
    %v1555 = vcombine.high %v1553, %v1553
    %v1556 = vlaneseq
    %v1557 = vshrl.u32 %v1556, 7
    %v1558 = vsub.s32 0, %v1557
    %v1559 = vrot.slane %v1546, %v1558
    %v1560 = vlaneseq
    %v1561 = vshrl.u32 %v1560, 7
    %v1562 = vsub.s32 0, %v1561
    %v1563 = vrot.slane %v1553, %v1562
    %v1564 = vlaneseq
    %v1565 = vshrl.u32 %v1564, 7
    %v1566 = vsub.s32 0, %v1565
    %v1567 = vrot.slane %v1554, %v1566
    %v1568 = vlaneseq
    %v1569 = vshrl.u32 %v1568, 7
    %v1570 = vsub.s32 0, %v1569
    %v1571 = vrot.slane %v1555, %v1570
    %v1576 = vmul.f32 %v1559, %v1526
    %v1577 = vmul.f32 %v1563, %v1526
    %v1578 = vmul.f32 %v1567, %v1526
    %v1579 = vmul.f32 %v1571, %v1526
    %v1580 = vsub.f32 %v1527, %v1576
    %v1581 = vsub.f32 %v1528, %v1577
    %v1582 = vsub.f32 %v1529, %v1578
    %v1583 = vsub.f32 %v1530, %v1579
    %v1584 = vmul.f32 %v1525, 0.5
    %v1585 = vmul.f32 %v1526, %v1526
    %v1586 = vsub.f32 %v1584, %v1585
    %v1587 = vmul.f32 %v1580, %v1580
    %v1588 = vmul.f32 %v1581, %v1581
    %v1589 = vmul.f32 %v1582, %v1582
    %v1590 = vmul.f32 %v1583, %v1583
    %v1591 = vsel %vm1505, %v1587, 0.0
    %v1592 = vsel %vm1505, %v1588, 0.0
    %v1593 = vadd.f32 %v1591, %v1592
    %v1594 = vsel %vm1505, %v1589, 0.0
    %v1595 = vadd.f32 %v1593, %v1594
    %v1596 = vsel %vm1505, %v1590, 0.0
    %v1597 = vadd.f32 %v1595, %v1596
    %1598 = vadd.xlane.f32.xlu0 %v1597
    %v1599 = vpop.xlane.xlu0 %1598
    %v1600 = vrot.slane %v1599, 4
    %v1601 = vadd.f32 %v1599, %v1600
    %v1602 = vrot.slane %v1601, 2
    %v1603 = vadd.f32 %v1601, %v1602
    %v1604 = vrot.slane %v1603, 1
    %v1605 = vadd.f32 %v1603, %v1604
    %s1606 = vtos %v1605
    %v1607 = vmul.f32 %v1586, %v1586
    %v1608 = vsel %vm1505, %v1607, 0.0
    %1609 = vadd.xlane.f32.xlu0 %v1608
    %v1610 = vpop.xlane.xlu0 %1609
    %v1611 = vrot.slane %v1610, 4
    %v1612 = vadd.f32 %v1610, %v1611
    %v1613 = vrot.slane %v1612, 2
    %v1614 = vadd.f32 %v1612, %v1613
    %v1615 = vrot.slane %v1614, 1
    %v1616 = vadd.f32 %v1614, %v1615
    %s1617 = vtos %v1616
    %s1618 = ssub.f32 %s1606, %s1617
    %v1620 = vunpack.c.l.s4 1966171168
    %v1621 = vunpack.c.0.s8 %v1620
    %v1622 = vlaneseq
    %v1623 = vshrl.u32 %v1622, 7
    %v1624 = vsub.s32 %v1621, %v1623
    %v1625 = vrot.slane %v1098, %v1624
    %v1626 = vcombine.high %v1625, %v1625
    %v1628 = vunpack.c.l.s4 1966171168
    %v1629 = vunpack.c.0.s8 %v1628
    %v1630 = vlaneseq
    %v1631 = vshrl.u32 %v1630, 7
    %v1632 = vsub.s32 %v1629, %v1631
    %v1633 = vrot.slane %v1625, %v1632
    %v1635 = vunpack.c.l.s4 1966171168
    %v1636 = vunpack.c.0.s8 %v1635
    %v1637 = vlaneseq
    %v1638 = vshrl.u32 %v1637, 7
    %v1639 = vsub.s32 %v1636, %v1638
    %v1640 = vrot.slane %v1626, %v1639
    %v1641 = vcombine.high %v1633, %v1633
    %v1642 = vcombine.high %v1640, %v1640
    %v1644 = vunpack.c.l.s4 1966171168
    %v1645 = vunpack.c.0.s8 %v1644
    %v1646 = vlaneseq
    %v1647 = vshrl.u32 %v1646, 7
    %v1648 = vsub.s32 %v1645, %v1647
    %v1649 = vrot.slane %v1099, %v1648
    %v1650 = vcombine.high %v1649, %v1649
    %v1652 = vunpack.c.l.s4 1966171168
    %v1653 = vunpack.c.0.s8 %v1652
    %v1654 = vlaneseq
    %v1655 = vshrl.u32 %v1654, 7
    %v1656 = vsub.s32 %v1653, %v1655
    %v1657 = vrot.slane %v1649, %v1656
    %v1659 = vunpack.c.l.s4 1966171168
    %v1660 = vunpack.c.0.s8 %v1659
    %v1661 = vlaneseq
    %v1662 = vshrl.u32 %v1661, 7
    %v1663 = vsub.s32 %v1660, %v1662
    %v1664 = vrot.slane %v1650, %v1663
    %v1665 = vcombine.high %v1657, %v1657
    %v1666 = vcombine.high %v1664, %v1664
    %v1667 = vlaneseq
    %v1668 = vshrl.u32 %v1667, 7
    %v1669 = vsub.s32 0, %v1668
    %v1670 = vrot.slane %v1633, %v1669
    %v1671 = vlaneseq
    %v1672 = vshrl.u32 %v1671, 7
    %v1673 = vsub.s32 0, %v1672
    %v1674 = vrot.slane %v1640, %v1673
    %v1675 = vlaneseq
    %v1676 = vshrl.u32 %v1675, 7
    %v1677 = vsub.s32 0, %v1676
    %v1678 = vrot.slane %v1641, %v1677
    %v1679 = vlaneseq
    %v1680 = vshrl.u32 %v1679, 7
    %v1681 = vsub.s32 0, %v1680
    %v1682 = vrot.slane %v1642, %v1681
    %v1683 = vlaneseq
    %v1684 = vshrl.u32 %v1683, 7
    %v1685 = vsub.s32 0, %v1684
    %v1686 = vrot.slane %v1657, %v1685
    %v1687 = vlaneseq
    %v1688 = vshrl.u32 %v1687, 7
    %v1689 = vsub.s32 0, %v1688
    %v1690 = vrot.slane %v1664, %v1689
    %v1691 = vlaneseq
    %v1692 = vshrl.u32 %v1691, 7
    %v1693 = vsub.s32 0, %v1692
    %v1694 = vrot.slane %v1665, %v1693
    %v1695 = vlaneseq
    %v1696 = vshrl.u32 %v1695, 7
    %v1697 = vsub.s32 0, %v1696
    %v1698 = vrot.slane %v1666, %v1697
    %v1707 = vmul.f32 %v1670, %v1098
    %v1708 = vmul.f32 %v1674, %v1098
    %v1709 = vmul.f32 %v1678, %v1098
    %v1710 = vmul.f32 %v1682, %v1098
    %v1711 = vmul.f32 %v1686, %v1099
    %v1712 = vmul.f32 %v1690, %v1099
    %v1713 = vmul.f32 %v1694, %v1099
    %v1714 = vmul.f32 %v1698, %v1099
    %vm1715 = vcmask 519168
    %v1716 = vsel %vm1715, %v1707, 0.0
    %v1717 = vsel %vm1715, %v1711, 0.0
    %v1718 = vadd.f32 %v1716, %v1717
    %v1719 = vsel %vm1715, %v1708, 0.0
    %v1720 = vsel %vm1715, %v1712, 0.0
    %v1721 = vadd.f32 %v1719, %v1720
    %v1722 = vsel %vm1715, %v1709, 0.0
    %v1723 = vsel %vm1715, %v1713, 0.0
    %v1724 = vadd.f32 %v1722, %v1723
    %v1725 = vsel %vm1715, %v1710, 0.0
    %v1726 = vsel %vm1715, %v1714, 0.0
    %v1727 = vadd.f32 %v1725, %v1726
    %v1728 = vsel %vm1715, %v1098, 0.0
    %v1729 = vsel %vm1715, %v1099, 0.0
    %v1730 = vadd.f32 %v1728, %v1729
    %v1731 = vmul.f32 %v1098, %v1098
    %v1732 = vmul.f32 %v1099, %v1099
    %v1733 = vsel %vm1715, %v1731, 0.0
    %v1734 = vsel %vm1715, %v1732, 0.0
    %v1735 = vadd.f32 %v1733, %v1734
    %v1736 = vmul.f32 %v1730, 0.5
    %v1737 = vmul.f32 %v1718, 0.5
    %v1738 = vmul.f32 %v1721, 0.5
    %v1739 = vmul.f32 %v1724, 0.5
    %v1740 = vmul.f32 %v1727, 0.5
    %v1743 = vunpack.c.l.s4 1966171168
    %v1744 = vunpack.c.0.s8 %v1743
    %v1745 = vlaneseq
    %v1746 = vshrl.u32 %v1745, 7
    %v1747 = vsub.s32 %v1744, %v1746
    %v1748 = vrot.slane %v1736, %v1747
    %v1749 = vcombine.high %v1748, %v1748
    %v1751 = vunpack.c.l.s4 1966171168
    %v1752 = vunpack.c.0.s8 %v1751
    %v1753 = vlaneseq
    %v1754 = vshrl.u32 %v1753, 7
    %v1755 = vsub.s32 %v1752, %v1754
    %v1756 = vrot.slane %v1748, %v1755
    %v1758 = vunpack.c.l.s4 1966171168
    %v1759 = vunpack.c.0.s8 %v1758
    %v1760 = vlaneseq
    %v1761 = vshrl.u32 %v1760, 7
    %v1762 = vsub.s32 %v1759, %v1761
    %v1763 = vrot.slane %v1749, %v1762
    %v1764 = vcombine.high %v1756, %v1756
    %v1765 = vcombine.high %v1763, %v1763
    %v1766 = vlaneseq
    %v1767 = vshrl.u32 %v1766, 7
    %v1768 = vsub.s32 0, %v1767
    %v1769 = vrot.slane %v1756, %v1768
    %v1770 = vlaneseq
    %v1771 = vshrl.u32 %v1770, 7
    %v1772 = vsub.s32 0, %v1771
    %v1773 = vrot.slane %v1763, %v1772
    %v1774 = vlaneseq
    %v1775 = vshrl.u32 %v1774, 7
    %v1776 = vsub.s32 0, %v1775
    %v1777 = vrot.slane %v1764, %v1776
    %v1778 = vlaneseq
    %v1779 = vshrl.u32 %v1778, 7
    %v1780 = vsub.s32 0, %v1779
    %v1781 = vrot.slane %v1765, %v1780
    %v1786 = vmul.f32 %v1769, %v1736
    %v1787 = vmul.f32 %v1773, %v1736
    %v1788 = vmul.f32 %v1777, %v1736
    %v1789 = vmul.f32 %v1781, %v1736
    %v1790 = vsub.f32 %v1737, %v1786
    %v1791 = vsub.f32 %v1738, %v1787
    %v1792 = vsub.f32 %v1739, %v1788
    %v1793 = vsub.f32 %v1740, %v1789
    %v1794 = vmul.f32 %v1735, 0.5
    %v1795 = vmul.f32 %v1736, %v1736
    %v1796 = vsub.f32 %v1794, %v1795
    %v1797 = vmul.f32 %v1790, %v1790
    %v1798 = vmul.f32 %v1791, %v1791
    %v1799 = vmul.f32 %v1792, %v1792
    %v1800 = vmul.f32 %v1793, %v1793
    %v1801 = vsel %vm1715, %v1797, 0.0
    %v1802 = vsel %vm1715, %v1798, 0.0
    %v1803 = vadd.f32 %v1801, %v1802
    %v1804 = vsel %vm1715, %v1799, 0.0
    %v1805 = vadd.f32 %v1803, %v1804
    %v1806 = vsel %vm1715, %v1800, 0.0
    %v1807 = vadd.f32 %v1805, %v1806
    %1808 = vadd.xlane.f32.xlu0 %v1807
    %v1809 = vpop.xlane.xlu0 %1808
    %v1810 = vrot.slane %v1809, 4
    %v1811 = vadd.f32 %v1809, %v1810
    %v1812 = vrot.slane %v1811, 2
    %v1813 = vadd.f32 %v1811, %v1812
    %v1814 = vrot.slane %v1813, 1
    %v1815 = vadd.f32 %v1813, %v1814
    %s1816 = vtos %v1815
    %v1817 = vmul.f32 %v1796, %v1796
    %v1818 = vsel %vm1715, %v1817, 0.0
    %1819 = vadd.xlane.f32.xlu0 %v1818
    %v1820 = vpop.xlane.xlu0 %1819
    %v1821 = vrot.slane %v1820, 4
    %v1822 = vadd.f32 %v1820, %v1821
    %v1823 = vrot.slane %v1822, 2
    %v1824 = vadd.f32 %v1822, %v1823
    %v1825 = vrot.slane %v1824, 1
    %v1826 = vadd.f32 %v1824, %v1825
    %s1827 = vtos %v1826
    %s1828 = ssub.f32 %s1816, %s1827
    %s1829 = sadd.f32 %s1618, %s1828
    %v1830 = vstv %s1829
    %vm1831 = vcmask 0
    %1832 = vst.msk [vmem:[#allocation4] sm:$0x1] %vm1831, %v1830
    // Predicated region
    $region34: #{mpnr_scores.1} parent=1 // pred_check
      _
    $region35: #{mpnr_scores.1} parent=1 // pred_check_branch
      %1834 = sbr.rel (0) target = $region37
    $region36: #{mpnr_scores.1} parent=1 // pred_region
      %s1836 = ssub.s32 32, 32
      %1837 = vsyncadd [#allocation3], %s1836
      %s1838 = sshll.u32 [#allocation2], 4
      %s1839 = int_to_ptr.vmem [resolvable:$true] %s1838
      %1844 = dma.vmem_to_hbm [thread:$0]  %s1839, 32, %s8, [#allocation3], 16, 16, 1
    $region37: #{mpnr_scores.1} parent=1 // pred_fallthru
      _
    // Predicated region
    $region38: #{mpnr_scores.1} parent=1 // pred_check
      _
    $region39: #{mpnr_scores.1} parent=1 // pred_check_branch
      %1846 = sbr.rel (0) target = $region41
    $region40: #{mpnr_scores.1} parent=1 // pred_region
      %s1848 = ssub.s32 16, 16
      %1849 = vsyncadd [#allocation5], %s1848
      %s1851 = sshll.u32 [#allocation4], 4
      %s1852 = int_to_ptr.vmem [resolvable:$true] %s1851
      %1854 = dma.vmem_to_hbm [thread:$0]  %s1852, 16, %s9, [#allocation5]
    $region41: #{mpnr_scores.1} parent=1 // pred_fallthru
      _
    // Predicated region
    $region42: #{mpnr_scores.1} parent=1 // pred_check
      _
    $region43: #{mpnr_scores.1} parent=1 // pred_check_branch
      %1856 = sbr.rel (0) target = $region45
    $region44: #{mpnr_scores.1} parent=1 // pred_region
      %1857 = dma.done [#allocation3], 32
    $region45: #{mpnr_scores.1} parent=1 // pred_fallthru
      _
    // Predicated region
    $region46: #{mpnr_scores.1} parent=1 // pred_check
      _
    $region47: #{mpnr_scores.1} parent=1 // pred_check_branch
      %1859 = sbr.rel (0) target = $region49
    $region48: #{mpnr_scores.1} parent=1 // pred_region
      %1860 = dma.done [#allocation5], 16
    $region49: #{mpnr_scores.1} parent=1 // pred_fallthru
      _
    %1861 = vsyncpa [#allocation3], 1
    %1862 = vsyncpa [#allocation5], 1

</llo_original>
